<compile_context>
chip_gen: v5e
topology: v5e:2x2
jax: 0.10.0
libtpu: 0.0.40
codegen_flags: <defaults>
</compile_context>

<pallas_src>
import functools

import numpy as np
import jax
import jax.numpy as jnp
from jax import lax
from jax.experimental import pallas as pl
from jax.experimental.pallas import tpu as pltpu

LN_EPS = 1e-5
INV_SQRT2 = 0.7071067811865476


# ----------------------------------------------------------------------------
# Pallas kernel: ONE transformer block for ONE batch element per grid step.
# grid = (B, L); the residual-stream activation is carried across the layer
# axis in a persistent VMEM scratch.
# ----------------------------------------------------------------------------
def _encoder_layer_kernel(x_ref,
                          ln1g_ref, ln1b_ref, wqkv_ref, w0_ref,
                          ln2g_ref, ln2b_ref, w1_ref, b1_ref, w2_ref, b2_ref,
                          o_ref, x_scr,
                          *, heads, dh, extract, scale):
    l = pl.program_id(1)
    Hdh = heads * dh

    @pl.when(l == 0)
    def _init():
        x_scr[...] = x_ref[0]           # load this batch element's tokens (T, D)

    x = x_scr[...]                       # (T, D) f32 residual stream

    def mm(a_f32, w_bf16):
        # bf16 x bf16 on the MXU, f32 accumulate.
        return jnp.dot(a_f32.astype(jnp.bfloat16), w_bf16,
                       preferred_element_type=jnp.float32)

    # ---- LayerNorm 1 (pre-norm), f32 ----
    mu = jnp.mean(x, axis=-1, keepdims=True)
    var = jnp.mean(jnp.square(x - mu), axis=-1, keepdims=True)
    xn = (x - mu) * lax.rsqrt(var + LN_EPS) * ln1g_ref[0] + ln1b_ref[0]

    # ---- fused QKV projection: ONE (T, D) x (D, 3*Hdh) matmul ----
    qkv = mm(xn, wqkv_ref[0])            # (T, 3*Hdh) f32, head-major columns
    q = qkv[:, :Hdh]
    k = qkv[:, Hdh:2 * Hdh]
    v = qkv[:, 2 * Hdh:]

    # ---- per-head attention (exact per-head softmax, f32) ----
    head_outs = []
    for h in range(heads):
        lo, hi = h * dh, (h + 1) * dh
        qh = q[:, lo:hi].astype(jnp.bfloat16)
        kh = k[:, lo:hi].astype(jnp.bfloat16)
        vh = v[:, lo:hi].astype(jnp.bfloat16)
        s = lax.dot_general(qh, kh, (((1,), (1,)), ((), ())),
                            preferred_element_type=jnp.float32) * scale  # (T, T)
        s = s - jnp.max(s, axis=-1, keepdims=True)
        p = jnp.exp(s)
        denom = jnp.sum(p, axis=-1, keepdims=True)
        p = p * pl.reciprocal(denom, approx=False)
        head_outs.append(jnp.dot(p.astype(jnp.bfloat16), vh,
                                 preferred_element_type=jnp.float32))     # (T, dh)
    attn = jnp.concatenate(head_outs, axis=-1)                            # (T, Hdh)

    # ---- output projection + residual ----
    y = mm(attn, w0_ref[0]) + x

    # ---- LayerNorm 2 + MLP: Linear -> GELU(exact erf) -> Linear, residual ----
    mu2 = jnp.mean(y, axis=-1, keepdims=True)
    var2 = jnp.mean(jnp.square(y - mu2), axis=-1, keepdims=True)
    yn = (y - mu2) * lax.rsqrt(var2 + LN_EPS) * ln2g_ref[0] + ln2b_ref[0]
    h1 = mm(yn, w1_ref[0]) + b1_ref[0]
    h1 = 0.5 * h1 * (1.0 + lax.erf(h1 * INV_SQRT2))
    x_new = mm(h1, w2_ref[0]) + b2_ref[0] + y

    x_scr[...] = x_new                   # carry to the next layer step

    is_extract = functools.reduce(
        jnp.logical_or, [l == (le - 1) for le in extract])

    @pl.when(is_extract)
    def _store():
        o_ref[0, 0] = x_new


# ----------------------------------------------------------------------------
# Wrapper
# ----------------------------------------------------------------------------
def transformer_encoder_pallas(x, stacked, extract_layers, *, heads, dh):
    """Fused TransformerEncoder forward.  x: (B, T, D) f32.
    Returns the list of extracted layer outputs, each (B, T, D)."""
    B, T, D = x.shape
    L = int(stacked["wqkv"].shape[0])
    extract = tuple(int(e) for e in extract_layers)
    assert list(extract) == sorted(extract), "extract_layers must be increasing"
    E = len(extract)
    scale = float(dh) ** -0.5

    names = ("ln1_g", "ln1_b", "wqkv", "w0", "ln2_g", "ln2_b",
             "w1", "b1", "w2", "b2")

    def layer_spec(arr):
        shp = tuple(arr.shape)           # (L, a, b) -> one layer per grid step
        return pl.BlockSpec((1,) + shp[1:], lambda b, l: (l, 0, 0))

    in_specs = [pl.BlockSpec((1, T, D), lambda b, l: (b, 0, 0))]
    in_specs += [layer_spec(stacked[n]) for n in names]

    # Extraction slot for layer l = number of extraction layers <= l; the slot
    # index only advances right AFTER the step that writes it, so every output
    # block's run of grid steps ends with (or keeps) its written contents.
    def out_index_map(b, l):
        e = 0
        for le in extract:
            e = e + jnp.where(l >= le, 1, 0)
        return (jnp.minimum(e, E - 1), b, 0, 0)

    out_spec = pl.BlockSpec((1, 1, T, D), out_index_map)

    # Explicit VMEM budget: double-buffered per-layer weights + activations.
    per_layer_w_bytes = sum(int(stacked[n].nbytes) // L for n in names)
    vmem_limit = 2 * per_layer_w_bytes + 8 * T * D * 4 + (4 << 20)
    vmem_limit = int(min(max(vmem_limit, 8 << 20), 100 << 20))

    kernel = functools.partial(_encoder_layer_kernel, heads=heads, dh=dh,
                               extract=extract, scale=scale)

    out = pl.pallas_call(
        kernel,
        out_shape=jax.ShapeDtypeStruct((E, B, T, D), jnp.float32),
        grid_spec=pltpu.PrefetchScalarGridSpec(
            num_scalar_prefetch=0,
            grid=(B, L),                               # batch parallel, layer pipelined
            in_specs=in_specs,
            out_specs=out_spec,
            scratch_shapes=[pltpu.VMEM((T, D), jnp.float32)],
        ),
        compiler_params=pltpu.CompilerParams(
            dimension_semantics=("parallel", "arbitrary"),
            vmem_limit_bytes=vmem_limit),
    )(x, *[stacked[n] for n in names])

    return [out[e] for e in range(E)]


# ----------------------------------------------------------------------------
# Parameter setup (glue): deterministic init in PyTorch layout, converted to the
# kernel-friendly layout (including the einops 'b t (d k h)' column split).
# ----------------------------------------------------------------------------
def init_block_params(key, dim, heads, dff):
    dh = dim // heads
    _dim = dh * heads
    ks = jax.random.split(key, 10)
    s = 0.05
    # PyTorch-layout weights: Linear weight is (out_features, in_features)
    pt = {
        "to_qvk": jax.random.normal(ks[0], (3 * _dim, dim), jnp.float32) * s,
        "w0":     jax.random.normal(ks[1], (dim, _dim), jnp.float32) * s,
        "ln1_g":  1.0 + 0.1 * jax.random.normal(ks[2], (1, dim), jnp.float32),
        "ln1_b":  0.1 * jax.random.normal(ks[3], (1, dim), jnp.float32),
        "ln2_g":  1.0 + 0.1 * jax.random.normal(ks[4], (1, dim), jnp.float32),
        "ln2_b":  0.1 * jax.random.normal(ks[5], (1, dim), jnp.float32),
        "w1":     jax.random.normal(ks[6], (dff, dim), jnp.float32) * s,
        "b1":     jax.random.normal(ks[7], (1, dff), jnp.float32) * s,
        "w2":     jax.random.normal(ks[8], (dim, dff), jnp.float32) * s,
        "b2":     jax.random.normal(ks[9], (1, dim), jnp.float32) * s,
    }
    # Kernel layout: right-multiply weights, with qkv columns permuted so q/k/v
    # are each contiguous and head-major (matches einops 'b t (d k h)').
    WqkvT = pt["to_qvk"].T                    # (dim, 3*_dim), column o = (d*3+k)*H+h
    d_idx = np.arange(dh)
    h_idx = np.arange(heads)

    def cols(kk):
        grid = (d_idx[None, :] * 3 + kk) * heads + h_idx[:, None]   # (H, dh)
        return grid.reshape(-1)

    perm = np.concatenate([cols(0), cols(1), cols(2)])
    kp = {
        "wqkv": WqkvT[:, perm],               # (dim, 3*_dim): [Q | K | V], head-major
        "w0": pt["w0"].T,                     # (_dim, dim), rows are (h, d)-major
        "w1": pt["w1"].T,                     # (dim, dff)
        "w2": pt["w2"].T,                     # (dff, dim)
        "b1": pt["b1"], "b2": pt["b2"],
        "ln1_g": pt["ln1_g"], "ln1_b": pt["ln1_b"],
        "ln2_g": pt["ln2_g"], "ln2_b": pt["ln2_b"],
    }
    return pt, kp


def stack_layer_params(layer_kp):
    """Stack per-layer kernel params along a leading layer axis; heavy matmul
    weights are stored in bf16 (halves HBM traffic / VMEM), small affine params
    stay f32."""
    stacked = {k: jnp.stack([p[k] for p in layer_kp], axis=0) for k in layer_kp[0]}
    for k in ("wqkv", "w0", "w1", "w2"):
        stacked[k] = stacked[k].astype(jnp.bfloat16)
    return stacked


# ----------------------------------------------------------------------------
# Pure-JAX reference (PyTorch semantics, PyTorch weight layout, f32) for validation.
# ----------------------------------------------------------------------------
def _ref_block(x, pt, heads, dh):
    def ln(z, g, b):
        mu = z.mean(-1, keepdims=True)
        var = ((z - mu) ** 2).mean(-1, keepdims=True)
        return (z - mu) / jnp.sqrt(var + LN_EPS) * g + b

    B, T, D = x.shape
    xn = ln(x, pt["ln1_g"][0], pt["ln1_b"][0])
    qkv = xn @ pt["to_qvk"].T                        # (B, T, 3*H*dh)
    qkv = qkv.reshape(B, T, dh, 3, heads)            # einops 'b t (d k h)'
    q = jnp.transpose(qkv[:, :, :, 0, :], (0, 3, 1, 2))
    k = jnp.transpose(qkv[:, :, :, 1, :], (0, 3, 1, 2))
    v = jnp.transpose(qkv[:, :, :, 2, :], (0, 3, 1, 2))
    s = jnp.einsum('bhtd,bhsd->bhts', q, k) * (dh ** -0.5)
    a = jax.nn.softmax(s, axis=-1)
    o = jnp.einsum('bhts,bhsd->bhtd', a, v)
    o = jnp.transpose(o, (0, 2, 1, 3)).reshape(B, T, heads * dh)
    y = o @ pt["w0"].T + x
    yn = ln(y, pt["ln2_g"][0], pt["ln2_b"][0])
    h1 = yn @ pt["w1"].T + pt["b1"][0]
    h1 = 0.5 * h1 * (1.0 + jax.lax.erf(h1 * INV_SQRT2))
    return h1 @ pt["w2"].T + pt["b2"][0] + y


def _ref_encoder(x, layer_pt, extract_layers, heads, dh):
    outs = []
    for depth, pt in enumerate(layer_pt):
        x = _ref_block(x, pt, heads, dh)
        if depth + 1 in extract_layers:
            outs.append(x)
    return outs


# ----------------------------------------------------------------------------
if __name__ == "__main__":
    embed_dim = 32
    num_heads = 4
    num_layers = 4
    dim_linear_block = 64
    extract_layers = [2, 4]
    batch, seq = 2, 8
    dh = embed_dim // num_heads

    key = jax.random.PRNGKey(0)
    kx, kp = jax.random.split(key)
    x = jax.random.normal(kx, (batch, seq, embed_dim), jnp.float32)

    layer_pt, layer_kp = [], []
    for lkey in jax.random.split(kp, num_layers):
        pt, kpar = init_block_params(lkey, embed_dim, num_heads, dim_linear_block)
        layer_pt.append(pt)
        layer_kp.append(kpar)
    stacked = stack_layer_params(layer_kp)

    outs = transformer_encoder_pallas(x, stacked, extract_layers,
                                      heads=num_heads, dh=dh)
    outs = [jax.block_until_ready(o) for o in outs]

    refs = _ref_encoder(x, layer_pt, extract_layers, num_heads, dh)
    # Tolerance sized for bf16 matmul operands (weights + activations rounded to
    # bf16, f32 accumulate) compared against a full-f32 reference; still 1-2
    # orders of magnitude below any layout/permutation-bug error scale.
    for o, r in zip(outs, refs):
        np.testing.assert_allclose(np.asarray(o), np.asarray(r),
                                   rtol=2e-2, atol=2e-2)

    print("KERNEL_OK")
</pallas_src>

<mosaic_0001>
module attributes {stable_mosaic.version = 11 : i64} {
  func.func @_encoder_layer_kernel(%arg0: i32, %arg1: i32, %arg2: memref<1x8x32xf32, #tpu.memory_space<vmem>>, %arg3: memref<1x1x32xf32, #tpu.memory_space<vmem>>, %arg4: memref<1x1x32xf32, #tpu.memory_space<vmem>>, %arg5: memref<1x32x96xbf16, #tpu.memory_space<vmem>>, %arg6: memref<1x32x32xbf16, #tpu.memory_space<vmem>>, %arg7: memref<1x1x32xf32, #tpu.memory_space<vmem>>, %arg8: memref<1x1x32xf32, #tpu.memory_space<vmem>>, %arg9: memref<1x32x64xbf16, #tpu.memory_space<vmem>>, %arg10: memref<1x1x64xf32, #tpu.memory_space<vmem>>, %arg11: memref<1x64x32xbf16, #tpu.memory_space<vmem>>, %arg12: memref<1x1x32xf32, #tpu.memory_space<vmem>>, %arg13: memref<1x1x8x32xf32, #tpu.memory_space<vmem>>, %arg14: memref<8x32xf32, #tpu.memory_space<vmem>>) attributes {dimension_semantics = [#tpu.dimension_semantics<parallel>, #tpu.dimension_semantics<arbitrary>], iteration_bounds = array<i64: 2, 4>, scalar_prefetch = 0 : i64, scratch_operands = 1 : i64, tpu.core_type = #tpu.core_type<tc>, window_params = [{transform_indices = @transform_0, window_bounds = array<i64: 1, 8, 32>}, {transform_indices = @transform_1, window_bounds = array<i64: 1, 1, 32>}, {transform_indices = @transform_2, window_bounds = array<i64: 1, 1, 32>}, {transform_indices = @transform_3, window_bounds = array<i64: 1, 32, 96>}, {transform_indices = @transform_4, window_bounds = array<i64: 1, 32, 32>}, {transform_indices = @transform_5, window_bounds = array<i64: 1, 1, 32>}, {transform_indices = @transform_6, window_bounds = array<i64: 1, 1, 32>}, {transform_indices = @transform_7, window_bounds = array<i64: 1, 32, 64>}, {transform_indices = @transform_8, window_bounds = array<i64: 1, 1, 64>}, {transform_indices = @transform_9, window_bounds = array<i64: 1, 64, 32>}, {transform_indices = @transform_10, window_bounds = array<i64: 1, 1, 32>}, {transform_indices = @transform_11, window_bounds = array<i64: 1, 1, 8, 32>}]} {
    %c0_i32 = arith.constant 0 : i32
    %0 = arith.cmpi eq, %arg1, %c0_i32 : i32
    %1 = arith.extui %0 : i1 to i32
    %c0_i32_0 = arith.constant 0 : i32
    %2 = arith.cmpi ne, %1, %c0_i32_0 : i32
    scf.if %2 {
      %c0_71 = arith.constant 0 : index
      %c0_72 = arith.constant 0 : index
      %c0_73 = arith.constant 0 : index
      %184 = vector.load %arg2[%c0_71, %c0_72, %c0_73] : memref<1x8x32xf32, #tpu.memory_space<vmem>>, vector<1x8x32xf32>
      %185 = vector.shape_cast %184 : vector<1x8x32xf32> to vector<8x32xf32>
      %c0_74 = arith.constant 0 : index
      %c0_75 = arith.constant 0 : index
      %186 = vector.load %arg14[%c0_74, %c0_75] : memref<8x32xf32, #tpu.memory_space<vmem>>, vector<8x32xf32>
      tpu.vector_store %arg14[%c0_74, %c0_75], %185 {strides = array<i32>} : memref<8x32xf32, #tpu.memory_space<vmem>>, vector<8x32xf32>,
    } else {
    }
    %c0 = arith.constant 0 : index
    %c0_1 = arith.constant 0 : index
    %3 = vector.load %arg14[%c0, %c0_1] : memref<8x32xf32, #tpu.memory_space<vmem>>, vector<8x32xf32>
    %cst = arith.constant dense<0.000000e+00> : vector<8xf32>
    %4 = vector.multi_reduction <add>, %3, %cst [1] : vector<8x32xf32> to vector<8xf32>
    %5 = vector.shape_cast %4 : vector<8xf32> to vector<8x1xf32>
    %cst_2 = arith.constant 3.200000e+01 : f32
    %6 = vector.broadcast %cst_2 : f32 to vector<8x1xf32>
    %7 = arith.divf %5, %6 : vector<8x1xf32>
    %8 = vector.broadcast %7 : vector<8x1xf32> to vector<8x32xf32>
    %9 = arith.subf %3, %8 : vector<8x32xf32>
    %10 = arith.mulf %9, %9 : vector<8x32xf32>
    %cst_3 = arith.constant dense<0.000000e+00> : vector<8xf32>
    %11 = vector.multi_reduction <add>, %10, %cst_3 [1] : vector<8x32xf32> to vector<8xf32>
    %12 = vector.shape_cast %11 : vector<8xf32> to vector<8x1xf32>
    %cst_4 = arith.constant 3.200000e+01 : f32
    %13 = vector.broadcast %cst_4 : f32 to vector<8x1xf32>
    %14 = arith.divf %12, %13 : vector<8x1xf32>
    %15 = vector.broadcast %7 : vector<8x1xf32> to vector<8x32xf32>
    %16 = arith.subf %3, %15 : vector<8x32xf32>
    %cst_5 = arith.constant 9.99999974E-6 : f32
    %17 = vector.broadcast %cst_5 : f32 to vector<8x1xf32>
    %18 = arith.addf %14, %17 : vector<8x1xf32>
    %19 = math.rsqrt %18 : vector<8x1xf32>
    %20 = vector.broadcast %19 : vector<8x1xf32> to vector<8x32xf32>
    %21 = arith.mulf %16, %20 : vector<8x32xf32>
    %c0_6 = arith.constant 0 : index
    %c0_7 = arith.constant 0 : index
    %c0_8 = arith.constant 0 : index
    %22 = vector.load %arg3[%c0_6, %c0_7, %c0_8] : memref<1x1x32xf32, #tpu.memory_space<vmem>>, vector<1x1x32xf32>
    %23 = vector.shape_cast %22 : vector<1x1x32xf32> to vector<1x32xf32>
    %24 = vector.broadcast %23 : vector<1x32xf32> to vector<8x32xf32>
    %25 = arith.mulf %21, %24 : vector<8x32xf32>
    %c0_9 = arith.constant 0 : index
    %c0_10 = arith.constant 0 : index
    %c0_11 = arith.constant 0 : index
    %26 = vector.load %arg4[%c0_9, %c0_10, %c0_11] : memref<1x1x32xf32, #tpu.memory_space<vmem>>, vector<1x1x32xf32>
    %27 = vector.shape_cast %26 : vector<1x1x32xf32> to vector<1x32xf32>
    %28 = vector.broadcast %27 : vector<1x32xf32> to vector<8x32xf32>
    %29 = arith.addf %25, %28 : vector<8x32xf32>
    %c0_12 = arith.constant 0 : index
    %c0_13 = arith.constant 0 : index
    %c0_14 = arith.constant 0 : index
    %30 = vector.load %arg5[%c0_12, %c0_13, %c0_14] : memref<1x32x96xbf16, #tpu.memory_space<vmem>>, vector<1x32x96xbf16>
    %31 = vector.shape_cast %30 : vector<1x32x96xbf16> to vector<32x96xbf16>
    %32 = arith.truncf %29 : vector<8x32xf32> to vector<8x32xbf16>
    %cst_15 = arith.constant dense<0.000000e+00> : vector<8x96xf32>
    %33 = tpu.matmul %32, %31, %cst_15 {dimension_numbers = #tpu.dot_dimension_numbers<[1], [0], [0], [1], [0, 0, 1, 1], [], []>} : vector<8x32xbf16>, vector<32x96xbf16>, vector<8x96xf32> -> vector<8x96xf32>
    %34 = vector.extract_strided_slice %33 {offsets = [0, 0], sizes = [8, 32], strides = [1, 1]} : vector<8x96xf32> to vector<8x32xf32>
    %35 = vector.extract_strided_slice %33 {offsets = [0, 32], sizes = [8, 32], strides = [1, 1]} : vector<8x96xf32> to vector<8x32xf32>
    %36 = vector.extract_strided_slice %33 {offsets = [0, 64], sizes = [8, 32], strides = [1, 1]} : vector<8x96xf32> to vector<8x32xf32>
    %37 = vector.extract_strided_slice %34 {offsets = [0, 0], sizes = [8, 8], strides = [1, 1]} : vector<8x32xf32> to vector<8x8xf32>
    %38 = arith.truncf %37 : vector<8x8xf32> to vector<8x8xbf16>
    %39 = vector.extract_strided_slice %35 {offsets = [0, 0], sizes = [8, 8], strides = [1, 1]} : vector<8x32xf32> to vector<8x8xf32>
    %40 = arith.truncf %39 : vector<8x8xf32> to vector<8x8xbf16>
    %41 = vector.extract_strided_slice %36 {offsets = [0, 0], sizes = [8, 8], strides = [1, 1]} : vector<8x32xf32> to vector<8x8xf32>
    %42 = arith.truncf %41 : vector<8x8xf32> to vector<8x8xbf16>
    %cst_16 = arith.constant dense<0.000000e+00> : vector<8x8xf32>
    %43 = tpu.matmul %38, %40, %cst_16 {dimension_numbers = #tpu.dot_dimension_numbers<[1], [1], [0], [0], [0, 0, 1, 0], [], []>} : vector<8x8xbf16>, vector<8x8xbf16>, vector<8x8xf32> -> vector<8x8xf32>
    %cst_17 = arith.constant 0.353553385 : f32
    %44 = vector.broadcast %cst_17 : f32 to vector<8x8xf32>
    %45 = arith.mulf %43, %44 : vector<8x8xf32>
    %cst_18 = arith.constant dense<0xFF800000> : vector<8xf32>
    %46 = vector.multi_reduction <maximumf>, %45, %cst_18 [1] : vector<8x8xf32> to vector<8xf32>
    %47 = vector.shape_cast %46 : vector<8xf32> to vector<8x1xf32>
    %48 = vector.broadcast %47 : vector<8x1xf32> to vector<8x8xf32>
    %49 = arith.subf %45, %48 : vector<8x8xf32>
    %50 = math.exp %49 : vector<8x8xf32>
    %cst_19 = arith.constant dense<0.000000e+00> : vector<8xf32>
    %51 = vector.multi_reduction <add>, %50, %cst_19 [1] : vector<8x8xf32> to vector<8xf32>
    %52 = vector.shape_cast %51 : vector<8xf32> to vector<8x1xf32>
    %53 = tpu.reciprocal %52 : vector<8x1xf32> -> vector<8x1xf32>
    %54 = vector.broadcast %53 : vector<8x1xf32> to vector<8x8xf32>
    %55 = arith.mulf %50, %54 : vector<8x8xf32>
    %56 = arith.truncf %55 : vector<8x8xf32> to vector<8x8xbf16>
    %cst_20 = arith.constant dense<0.000000e+00> : vector<8x8xf32>
    %57 = tpu.matmul %56, %42, %cst_20 {dimension_numbers = #tpu.dot_dimension_numbers<[1], [0], [0], [1], [0, 0, 1, 1], [], []>} : vector<8x8xbf16>, vector<8x8xbf16>, vector<8x8xf32> -> vector<8x8xf32>
    %58 = vector.extract_strided_slice %34 {offsets = [0, 8], sizes = [8, 8], strides = [1, 1]} : vector<8x32xf32> to vector<8x8xf32>
    %59 = arith.truncf %58 : vector<8x8xf32> to vector<8x8xbf16>
    %60 = vector.extract_strided_slice %35 {offsets = [0, 8], sizes = [8, 8], strides = [1, 1]} : vector<8x32xf32> to vector<8x8xf32>
    %61 = arith.truncf %60 : vector<8x8xf32> to vector<8x8xbf16>
    %62 = vector.extract_strided_slice %36 {offsets = [0, 8], sizes = [8, 8], strides = [1, 1]} : vector<8x32xf32> to vector<8x8xf32>
    %63 = arith.truncf %62 : vector<8x8xf32> to vector<8x8xbf16>
    %cst_21 = arith.constant dense<0.000000e+00> : vector<8x8xf32>
    %64 = tpu.matmul %59, %61, %cst_21 {dimension_numbers = #tpu.dot_dimension_numbers<[1], [1], [0], [0], [0, 0, 1, 0], [], []>} : vector<8x8xbf16>, vector<8x8xbf16>, vector<8x8xf32> -> vector<8x8xf32>
    %cst_22 = arith.constant 0.353553385 : f32
    %65 = vector.broadcast %cst_22 : f32 to vector<8x8xf32>
    %66 = arith.mulf %64, %65 : vector<8x8xf32>
    %cst_23 = arith.constant dense<0xFF800000> : vector<8xf32>
    %67 = vector.multi_reduction <maximumf>, %66, %cst_23 [1] : vector<8x8xf32> to vector<8xf32>
    %68 = vector.shape_cast %67 : vector<8xf32> to vector<8x1xf32>
    %69 = vector.broadcast %68 : vector<8x1xf32> to vector<8x8xf32>
    %70 = arith.subf %66, %69 : vector<8x8xf32>
    %71 = math.exp %70 : vector<8x8xf32>
    %cst_24 = arith.constant dense<0.000000e+00> : vector<8xf32>
    %72 = vector.multi_reduction <add>, %71, %cst_24 [1] : vector<8x8xf32> to vector<8xf32>
    %73 = vector.shape_cast %72 : vector<8xf32> to vector<8x1xf32>
    %74 = tpu.reciprocal %73 : vector<8x1xf32> -> vector<8x1xf32>
    %75 = vector.broadcast %74 : vector<8x1xf32> to vector<8x8xf32>
    %76 = arith.mulf %71, %75 : vector<8x8xf32>
    %77 = arith.truncf %76 : vector<8x8xf32> to vector<8x8xbf16>
    %cst_25 = arith.constant dense<0.000000e+00> : vector<8x8xf32>
    %78 = tpu.matmul %77, %63, %cst_25 {dimension_numbers = #tpu.dot_dimension_numbers<[1], [0], [0], [1], [0, 0, 1, 1], [], []>} : vector<8x8xbf16>, vector<8x8xbf16>, vector<8x8xf32> -> vector<8x8xf32>
    %79 = vector.extract_strided_slice %34 {offsets = [0, 16], sizes = [8, 8], strides = [1, 1]} : vector<8x32xf32> to vector<8x8xf32>
    %80 = arith.truncf %79 : vector<8x8xf32> to vector<8x8xbf16>
    %81 = vector.extract_strided_slice %35 {offsets = [0, 16], sizes = [8, 8], strides = [1, 1]} : vector<8x32xf32> to vector<8x8xf32>
    %82 = arith.truncf %81 : vector<8x8xf32> to vector<8x8xbf16>
    %83 = vector.extract_strided_slice %36 {offsets = [0, 16], sizes = [8, 8], strides = [1, 1]} : vector<8x32xf32> to vector<8x8xf32>
    %84 = arith.truncf %83 : vector<8x8xf32> to vector<8x8xbf16>
    %cst_26 = arith.constant dense<0.000000e+00> : vector<8x8xf32>
    %85 = tpu.matmul %80, %82, %cst_26 {dimension_numbers = #tpu.dot_dimension_numbers<[1], [1], [0], [0], [0, 0, 1, 0], [], []>} : vector<8x8xbf16>, vector<8x8xbf16>, vector<8x8xf32> -> vector<8x8xf32>
    %cst_27 = arith.constant 0.353553385 : f32
    %86 = vector.broadcast %cst_27 : f32 to vector<8x8xf32>
    %87 = arith.mulf %85, %86 : vector<8x8xf32>
    %cst_28 = arith.constant dense<0xFF800000> : vector<8xf32>
    %88 = vector.multi_reduction <maximumf>, %87, %cst_28 [1] : vector<8x8xf32> to vector<8xf32>
    %89 = vector.shape_cast %88 : vector<8xf32> to vector<8x1xf32>
    %90 = vector.broadcast %89 : vector<8x1xf32> to vector<8x8xf32>
    %91 = arith.subf %87, %90 : vector<8x8xf32>
    %92 = math.exp %91 : vector<8x8xf32>
    %cst_29 = arith.constant dense<0.000000e+00> : vector<8xf32>
    %93 = vector.multi_reduction <add>, %92, %cst_29 [1] : vector<8x8xf32> to vector<8xf32>
    %94 = vector.shape_cast %93 : vector<8xf32> to vector<8x1xf32>
    %95 = tpu.reciprocal %94 : vector<8x1xf32> -> vector<8x1xf32>
    %96 = vector.broadcast %95 : vector<8x1xf32> to vector<8x8xf32>
    %97 = arith.mulf %92, %96 : vector<8x8xf32>
    %98 = arith.truncf %97 : vector<8x8xf32> to vector<8x8xbf16>
    %cst_30 = arith.constant dense<0.000000e+00> : vector<8x8xf32>
    %99 = tpu.matmul %98, %84, %cst_30 {dimension_numbers = #tpu.dot_dimension_numbers<[1], [0], [0], [1], [0, 0, 1, 1], [], []>} : vector<8x8xbf16>, vector<8x8xbf16>, vector<8x8xf32> -> vector<8x8xf32>
    %100 = vector.extract_strided_slice %34 {offsets = [0, 24], sizes = [8, 8], strides = [1, 1]} : vector<8x32xf32> to vector<8x8xf32>
    %101 = arith.truncf %100 : vector<8x8xf32> to vector<8x8xbf16>
    %102 = vector.extract_strided_slice %35 {offsets = [0, 24], sizes = [8, 8], strides = [1, 1]} : vector<8x32xf32> to vector<8x8xf32>
    %103 = arith.truncf %102 : vector<8x8xf32> to vector<8x8xbf16>
    %104 = vector.extract_strided_slice %36 {offsets = [0, 24], sizes = [8, 8], strides = [1, 1]} : vector<8x32xf32> to vector<8x8xf32>
    %105 = arith.truncf %104 : vector<8x8xf32> to vector<8x8xbf16>
    %cst_31 = arith.constant dense<0.000000e+00> : vector<8x8xf32>
    %106 = tpu.matmul %101, %103, %cst_31 {dimension_numbers = #tpu.dot_dimension_numbers<[1], [1], [0], [0], [0, 0, 1, 0], [], []>} : vector<8x8xbf16>, vector<8x8xbf16>, vector<8x8xf32> -> vector<8x8xf32>
    %cst_32 = arith.constant 0.353553385 : f32
    %107 = vector.broadcast %cst_32 : f32 to vector<8x8xf32>
    %108 = arith.mulf %106, %107 : vector<8x8xf32>
    %cst_33 = arith.constant dense<0xFF800000> : vector<8xf32>
    %109 = vector.multi_reduction <maximumf>, %108, %cst_33 [1] : vector<8x8xf32> to vector<8xf32>
    %110 = vector.shape_cast %109 : vector<8xf32> to vector<8x1xf32>
    %111 = vector.broadcast %110 : vector<8x1xf32> to vector<8x8xf32>
    %112 = arith.subf %108, %111 : vector<8x8xf32>
    %113 = math.exp %112 : vector<8x8xf32>
    %cst_34 = arith.constant dense<0.000000e+00> : vector<8xf32>
    %114 = vector.multi_reduction <add>, %113, %cst_34 [1] : vector<8x8xf32> to vector<8xf32>
    %115 = vector.shape_cast %114 : vector<8xf32> to vector<8x1xf32>
    %116 = tpu.reciprocal %115 : vector<8x1xf32> -> vector<8x1xf32>
    %117 = vector.broadcast %116 : vector<8x1xf32> to vector<8x8xf32>
    %118 = arith.mulf %113, %117 : vector<8x8xf32>
    %119 = arith.truncf %118 : vector<8x8xf32> to vector<8x8xbf16>
    %cst_35 = arith.constant dense<0.000000e+00> : vector<8x8xf32>
    %120 = tpu.matmul %119, %105, %cst_35 {dimension_numbers = #tpu.dot_dimension_numbers<[1], [0], [0], [1], [0, 0, 1, 1], [], []>} : vector<8x8xbf16>, vector<8x8xbf16>, vector<8x8xf32> -> vector<8x8xf32>
    %121 = tpu.concatenate %57, %78, %99, %120 in 1 : vector<8x8xf32>, vector<8x8xf32>, vector<8x8xf32>, vector<8x8xf32> -> vector<8x32xf32>
    %c0_36 = arith.constant 0 : index
    %c0_37 = arith.constant 0 : index
    %c0_38 = arith.constant 0 : index
    %122 = vector.load %arg6[%c0_36, %c0_37, %c0_38] : memref<1x32x32xbf16, #tpu.memory_space<vmem>>, vector<1x32x32xbf16>
    %123 = vector.shape_cast %122 : vector<1x32x32xbf16> to vector<32x32xbf16>
    %124 = arith.truncf %121 : vector<8x32xf32> to vector<8x32xbf16>
    %cst_39 = arith.constant dense<0.000000e+00> : vector<8x32xf32>
    %125 = tpu.matmul %124, %123, %cst_39 {dimension_numbers = #tpu.dot_dimension_numbers<[1], [0], [0], [1], [0, 0, 1, 1], [], []>} : vector<8x32xbf16>, vector<32x32xbf16>, vector<8x32xf32> -> vector<8x32xf32>
    %126 = arith.addf %125, %3 : vector<8x32xf32>
    %cst_40 = arith.constant dense<0.000000e+00> : vector<8xf32>
    %127 = vector.multi_reduction <add>, %126, %cst_40 [1] : vector<8x32xf32> to vector<8xf32>
    %128 = vector.shape_cast %127 : vector<8xf32> to vector<8x1xf32>
    %cst_41 = arith.constant 3.200000e+01 : f32
    %129 = vector.broadcast %cst_41 : f32 to vector<8x1xf32>
    %130 = arith.divf %128, %129 : vector<8x1xf32>
    %131 = vector.broadcast %130 : vector<8x1xf32> to vector<8x32xf32>
    %132 = arith.subf %126, %131 : vector<8x32xf32>
    %133 = arith.mulf %132, %132 : vector<8x32xf32>
    %cst_42 = arith.constant dense<0.000000e+00> : vector<8xf32>
    %134 = vector.multi_reduction <add>, %133, %cst_42 [1] : vector<8x32xf32> to vector<8xf32>
    %135 = vector.shape_cast %134 : vector<8xf32> to vector<8x1xf32>
    %cst_43 = arith.constant 3.200000e+01 : f32
    %136 = vector.broadcast %cst_43 : f32 to vector<8x1xf32>
    %137 = arith.divf %135, %136 : vector<8x1xf32>
    %138 = vector.broadcast %130 : vector<8x1xf32> to vector<8x32xf32>
    %139 = arith.subf %126, %138 : vector<8x32xf32>
    %cst_44 = arith.constant 9.99999974E-6 : f32
    %140 = vector.broadcast %cst_44 : f32 to vector<8x1xf32>
    %141 = arith.addf %137, %140 : vector<8x1xf32>
    %142 = math.rsqrt %141 : vector<8x1xf32>
    %143 = vector.broadcast %142 : vector<8x1xf32> to vector<8x32xf32>
    %144 = arith.mulf %139, %143 : vector<8x32xf32>
    %c0_45 = arith.constant 0 : index
    %c0_46 = arith.constant 0 : index
    %c0_47 = arith.constant 0 : index
    %145 = vector.load %arg7[%c0_45, %c0_46, %c0_47] : memref<1x1x32xf32, #tpu.memory_space<vmem>>, vector<1x1x32xf32>
    %146 = vector.shape_cast %145 : vector<1x1x32xf32> to vector<1x32xf32>
    %147 = vector.broadcast %146 : vector<1x32xf32> to vector<8x32xf32>
    %148 = arith.mulf %144, %147 : vector<8x32xf32>
    %c0_48 = arith.constant 0 : index
    %c0_49 = arith.constant 0 : index
    %c0_50 = arith.constant 0 : index
    %149 = vector.load %arg8[%c0_48, %c0_49, %c0_50] : memref<1x1x32xf32, #tpu.memory_space<vmem>>, vector<1x1x32xf32>
    %150 = vector.shape_cast %149 : vector<1x1x32xf32> to vector<1x32xf32>
    %151 = vector.broadcast %150 : vector<1x32xf32> to vector<8x32xf32>
    %152 = arith.addf %148, %151 : vector<8x32xf32>
    %c0_51 = arith.constant 0 : index
    %c0_52 = arith.constant 0 : index
    %c0_53 = arith.constant 0 : index
    %153 = vector.load %arg9[%c0_51, %c0_52, %c0_53] : memref<1x32x64xbf16, #tpu.memory_space<vmem>>, vector<1x32x64xbf16>
    %154 = vector.shape_cast %153 : vector<1x32x64xbf16> to vector<32x64xbf16>
    %155 = arith.truncf %152 : vector<8x32xf32> to vector<8x32xbf16>
    %cst_54 = arith.constant dense<0.000000e+00> : vector<8x64xf32>
    %156 = tpu.matmul %155, %154, %cst_54 {dimension_numbers = #tpu.dot_dimension_numbers<[1], [0], [0], [1], [0, 0, 1, 1], [], []>} : vector<8x32xbf16>, vector<32x64xbf16>, vector<8x64xf32> -> vector<8x64xf32>
    %c0_55 = arith.constant 0 : index
    %c0_56 = arith.constant 0 : index
    %c0_57 = arith.constant 0 : index
    %157 = vector.load %arg10[%c0_55, %c0_56, %c0_57] : memref<1x1x64xf32, #tpu.memory_space<vmem>>, vector<1x1x64xf32>
    %158 = vector.shape_cast %157 : vector<1x1x64xf32> to vector<1x64xf32>
    %159 = vector.broadcast %158 : vector<1x64xf32> to vector<8x64xf32>
    %160 = arith.addf %156, %159 : vector<8x64xf32>
    %cst_58 = arith.constant 5.000000e-01 : f32
    %161 = vector.broadcast %cst_58 : f32 to vector<8x64xf32>
    %162 = arith.mulf %161, %160 : vector<8x64xf32>
    %cst_59 = arith.constant 0.707106769 : f32
    %163 = vector.broadcast %cst_59 : f32 to vector<8x64xf32>
    %164 = arith.mulf %160, %163 : vector<8x64xf32>
    %165 = math.erf %164 : vector<8x64xf32>
    %cst_60 = arith.constant 1.000000e+00 : f32
    %166 = vector.broadcast %cst_60 : f32 to vector<8x64xf32>
    %167 = arith.addf %166, %165 : vector<8x64xf32>
    %168 = arith.mulf %162, %167 : vector<8x64xf32>
    %c0_61 = arith.constant 0 : index
    %c0_62 = arith.constant 0 : index
    %c0_63 = arith.constant 0 : index
    %169 = vector.load %arg11[%c0_61, %c0_62, %c0_63] : memref<1x64x32xbf16, #tpu.memory_space<vmem>>, vector<1x64x32xbf16>
    %170 = vector.shape_cast %169 : vector<1x64x32xbf16> to vector<64x32xbf16>
    %171 = arith.truncf %168 : vector<8x64xf32> to vector<8x64xbf16>
    %cst_64 = arith.constant dense<0.000000e+00> : vector<8x32xf32>
    %172 = tpu.matmul %171, %170, %cst_64 {dimension_numbers = #tpu.dot_dimension_numbers<[1], [0], [0], [1], [0, 0, 1, 1], [], []>} : vector<8x64xbf16>, vector<64x32xbf16>, vector<8x32xf32> -> vector<8x32xf32>
    %c0_65 = arith.constant 0 : index
    %c0_66 = arith.constant 0 : index
    %c0_67 = arith.constant 0 : index
    %173 = vector.load %arg12[%c0_65, %c0_66, %c0_67] : memref<1x1x32xf32, #tpu.memory_space<vmem>>, vector<1x1x32xf32>
    %174 = vector.shape_cast %173 : vector<1x1x32xf32> to vector<1x32xf32>
    %175 = vector.broadcast %174 : vector<1x32xf32> to vector<8x32xf32>
    %176 = arith.addf %172, %175 : vector<8x32xf32>
    %177 = arith.addf %176, %126 : vector<8x32xf32>
    %c0_68 = arith.constant 0 : index
    %c0_69 = arith.constant 0 : index
    %178 = vector.load %arg14[%c0_68, %c0_69] : memref<8x32xf32, #tpu.memory_space<vmem>>, vector<8x32xf32>
    tpu.vector_store %arg14[%c0_68, %c0_69], %177 {strides = array<i32>} : memref<8x32xf32, #tpu.memory_space<vmem>>, vector<8x32xf32>,
    %c1_i32 = arith.constant 1 : i32
    %179 = arith.cmpi eq, %arg1, %c1_i32 : i32
    %c3_i32 = arith.constant 3 : i32
    %180 = arith.cmpi eq, %arg1, %c3_i32 : i32
    %181 = arith.ori %179, %180 : i1
    %182 = arith.extui %181 : i1 to i32
    %c0_i32_70 = arith.constant 0 : i32
    %183 = arith.cmpi ne, %182, %c0_i32_70 : i32
    scf.if %183 {
      %c0_71 = arith.constant 0 : index
      %c0_72 = arith.constant 0 : index
      %c0_73 = arith.constant 0 : index
      %c0_74 = arith.constant 0 : index
      %184 = vector.load %arg13[%c0_71, %c0_72, %c0_73, %c0_74] : memref<1x1x8x32xf32, #tpu.memory_space<vmem>>, vector<1x1x8x32xf32>
      %185 = vector.shape_cast %184 : vector<1x1x8x32xf32> to vector<8x32xf32>
      %186 = vector.shape_cast %177 : vector<8x32xf32> to vector<1x1x8x32xf32>
      tpu.vector_store %arg13[%c0_71, %c0_72, %c0_73, %c0_74], %186 {strides = array<i32>} : memref<1x1x8x32xf32, #tpu.memory_space<vmem>>, vector<1x1x8x32xf32>,
    } else {
    }
    return
  }
  func.func @transform_0(%arg0: i32, %arg1: i32) -> (i32, i32, i32) {
    %c0_i32 = arith.constant 0 : i32
    %c0_i32_0 = arith.constant 0 : i32
    %c0_i32_1 = arith.constant 0 : i32
    return %arg0, %c0_i32, %c0_i32_0 : i32, i32, i32
  }
  func.func @transform_1(%arg0: i32, %arg1: i32) -> (i32, i32, i32) {
    %c0_i32 = arith.constant 0 : i32
    %c0_i32_0 = arith.constant 0 : i32
    %c0_i32_1 = arith.constant 0 : i32
    return %arg1, %c0_i32, %c0_i32_0 : i32, i32, i32
  }
  func.func @transform_2(%arg0: i32, %arg1: i32) -> (i32, i32, i32) {
    %c0_i32 = arith.constant 0 : i32
    %c0_i32_0 = arith.constant 0 : i32
    %c0_i32_1 = arith.constant 0 : i32
    return %arg1, %c0_i32, %c0_i32_0 : i32, i32, i32
  }
  func.func @transform_3(%arg0: i32, %arg1: i32) -> (i32, i32, i32) {
    %c0_i32 = arith.constant 0 : i32
    %c0_i32_0 = arith.constant 0 : i32
    %c0_i32_1 = arith.constant 0 : i32
    return %arg1, %c0_i32, %c0_i32_0 : i32, i32, i32
  }
  func.func @transform_4(%arg0: i32, %arg1: i32) -> (i32, i32, i32) {
    %c0_i32 = arith.constant 0 : i32
    %c0_i32_0 = arith.constant 0 : i32
    %c0_i32_1 = arith.constant 0 : i32
    return %arg1, %c0_i32, %c0_i32_0 : i32, i32, i32
  }
  func.func @transform_5(%arg0: i32, %arg1: i32) -> (i32, i32, i32) {
    %c0_i32 = arith.constant 0 : i32
    %c0_i32_0 = arith.constant 0 : i32
    %c0_i32_1 = arith.constant 0 : i32
    return %arg1, %c0_i32, %c0_i32_0 : i32, i32, i32
  }
  func.func @transform_6(%arg0: i32, %arg1: i32) -> (i32, i32, i32) {
    %c0_i32 = arith.constant 0 : i32
    %c0_i32_0 = arith.constant 0 : i32
    %c0_i32_1 = arith.constant 0 : i32
    return %arg1, %c0_i32, %c0_i32_0 : i32, i32, i32
  }
  func.func @transform_7(%arg0: i32, %arg1: i32) -> (i32, i32, i32) {
    %c0_i32 = arith.constant 0 : i32
    %c0_i32_0 = arith.constant 0 : i32
    %c0_i32_1 = arith.constant 0 : i32
    return %arg1, %c0_i32, %c0_i32_0 : i32, i32, i32
  }
  func.func @transform_8(%arg0: i32, %arg1: i32) -> (i32, i32, i32) {
    %c0_i32 = arith.constant 0 : i32
    %c0_i32_0 = arith.constant 0 : i32
    %c0_i32_1 = arith.constant 0 : i32
    return %arg1, %c0_i32, %c0_i32_0 : i32, i32, i32
  }
  func.func @transform_9(%arg0: i32, %arg1: i32) -> (i32, i32, i32) {
    %c0_i32 = arith.constant 0 : i32
    %c0_i32_0 = arith.constant 0 : i32
    %c0_i32_1 = arith.constant 0 : i32
    return %arg1, %c0_i32, %c0_i32_0 : i32, i32, i32
  }
  func.func @transform_10(%arg0: i32, %arg1: i32) -> (i32, i32, i32) {
    %c0_i32 = arith.constant 0 : i32
    %c0_i32_0 = arith.constant 0 : i32
    %c0_i32_1 = arith.constant 0 : i32
    return %arg1, %c0_i32, %c0_i32_0 : i32, i32, i32
  }
  func.func @transform_11(%arg0: i32, %arg1: i32) -> (i32, i32, i32, i32) {
    %c2_i32 = arith.constant 2 : i32
    %0 = arith.cmpi sge, %arg1, %c2_i32 : i32
    %c1_i32 = arith.constant 1 : i32
    %c0_i32 = arith.constant 0 : i32
    %1 = arith.select %0, %c1_i32, %c0_i32 : i32
    %c0_i32_0 = arith.constant 0 : i32
    %2 = arith.addi %c0_i32_0, %1 : i32
    %c4_i32 = arith.constant 4 : i32
    %3 = arith.cmpi sge, %arg1, %c4_i32 : i32
    %c1_i32_1 = arith.constant 1 : i32
    %c0_i32_2 = arith.constant 0 : i32
    %4 = arith.select %3, %c1_i32_1, %c0_i32_2 : i32
    %5 = arith.addi %2, %4 : i32
    %c1_i32_3 = arith.constant 1 : i32
    %6 = arith.minsi %5, %c1_i32_3 : i32
    %c0_i32_4 = arith.constant 0 : i32
    %c0_i32_5 = arith.constant 0 : i32
    %c0_i32_6 = arith.constant 0 : i32
    return %6, %arg0, %c0_i32_4, %c0_i32_5 : i32, i32, i32, i32
  }
}

</mosaic_0001>

<llo_original>
// kernel: tpu_custom_call.1
$region0: #{tpu_custom_call.1}
  #allocation0 [shape = 'u32[]', space=smem, size = 0x4, offset = 0x4, fixed_abs, tag = 'smem constant byte address 0x4 - core index']
  #allocation1 [shape = 'u32[72,128]{1,0:T(1,128)}', space=vmem, size = 0x9000, scoped, tag = 'internal scratch']
  #allocation2 [shape = 'f32[8,32]{1,0:T(8,128)}', space=vmem, size = 0x1000, scoped, tag = 'scratch operand']
  %s0 = inlined_call_operand.hbm [shape: f32[2,8,32], index: 0, kind: input, shape index: {}]
  %s1 = inlined_call_operand.hbm [shape: f32[4,1,32], index: 1, kind: input, shape index: {}]
  %s2 = inlined_call_operand.hbm [shape: f32[4,1,32], index: 2, kind: input, shape index: {}]
  %s3 = inlined_call_operand.vmem [shape: bf16[4,32,96], index: 3, kind: input, shape index: {}]
  %s4 = inlined_call_operand.vmem [shape: bf16[4,32,32], index: 4, kind: input, shape index: {}]
  %s5 = inlined_call_operand.hbm [shape: f32[4,1,32], index: 5, kind: input, shape index: {}]
  %s6 = inlined_call_operand.vmem [shape: f32[4,1,32], index: 6, kind: input, shape index: {}]
  %s7 = inlined_call_operand.vmem [shape: bf16[4,32,64], index: 7, kind: input, shape index: {}]
  %s8 = inlined_call_operand.hbm [shape: f32[4,1,64], index: 8, kind: input, shape index: {}]
  %s9 = inlined_call_operand.vmem [shape: bf16[4,64,32], index: 9, kind: input, shape index: {}]
  %s10 = inlined_call_operand.vmem [shape: f32[4,1,32], index: 10, kind: input, shape index: {}]
  %s11 = inlined_call_operand.hbm [shape: f32[2,2,8,32], index: 11, kind: output, shape index: {}]
  %s12 = sld [smem:[#allocation0]]
  $region105: #{tpu_custom_call.1} parent=0
    _
  %s14 = ssub.s32 1, %s12
  %s15 = scalar_select 0, %s14, %s12
  $region1: #{tpu_custom_call.1} parent=0
    #allocation3 [shape = 'u8[8192]{0}', space=vmem, size = 0x2000, scoped, tag = 'input window, operand 0']
    #allocation4 [shape = 's32[2]{0}', space=sflag, size = 0x8, scoped, tag = 'scoped memory for tpu_custom_call.1']
    #allocation5 [shape = 's32[2]{0}', space=sflag, size = 0x8, scoped, tag = 'scoped memory for tpu_custom_call.1']
    #allocation6 [shape = 'u8[1024]{0}', space=vmem, size = 0x400, scoped, tag = 'input window, operand 1']
    #allocation7 [shape = 's32[2]{0}', space=sflag, size = 0x8, scoped, tag = 'scoped memory for tpu_custom_call.1']
    #allocation8 [shape = 'u8[1024]{0}', space=vmem, size = 0x400, scoped, tag = 'input window, operand 2']
    #allocation9 [shape = 'u8[1024]{0}', space=vmem, size = 0x400, scoped, tag = 'input window, operand 5']
    #allocation10 [shape = 's32[2]{0}', space=sflag, size = 0x8, scoped, tag = 'scoped memory for tpu_custom_call.1']
    #allocation11 [shape = 'u8[1024]{0}', space=vmem, size = 0x400, scoped, tag = 'input window, operand 8']
    #allocation12 [shape = 'u8[8192]{0}', space=vmem, size = 0x2000, scoped, tag = 'output window, operand 0']
    %16 = vsyncpa [#allocation4], 0
    %s17 = scalar_lea.sflag [#allocation4], 1
    %18 = vsyncpa %s17, 0
    %19 = vsyncpa [#allocation7], 0
    %s20 = scalar_lea.sflag [#allocation7], 1
    %21 = vsyncpa %s20, 0
    %22 = vsyncpa [#allocation10], 0
    %s23 = scalar_lea.sflag [#allocation10], 1
    %24 = vsyncpa %s23, 0
    %25 = vsyncpa [#allocation5], 0
    %s26 = scalar_lea.sflag [#allocation5], 1
    %27 = vsyncpa %s26, 0
    loop: start=0, step=1, limit=10
    $region2: #{tpu_custom_call.1} parent=1 // loop_pre_header
      _
    $region3: #{tpu_custom_call.1} parent=1 // loop_header
      %s29 = sphi 0, %s33
      %p30 = scmp.ge.s32.totalorder %s29, 10
      %s36 = sphi 0, %s48
      %s37 = sphi 0, %s44
      %s38 = sphi 0, %s36
      %s39 = sphi 0, %s37
      %s40 = sphi 0, %s38
      %s41 = sphi 0, %s39
      %s51 = sphi 0, %s53
      %s54 = sphi 0, %s51
      %s55 = sphi 0, %s54
      %s71 = sphi 0, %s55
      %s77 = sphi 0, %s79
      %s80 = sphi 0, %s77
      %s81 = sphi 0, %s80
      %s97 = sphi 0, %s81
      %s103 = sphi 0, %s105
      %s106 = sphi 0, %s103
      %s107 = sphi 0, %s106
      %s123 = sphi 0, %s107
      %s129 = sphi 0, %s131
      %s132 = sphi 0, %s129
      %s133 = sphi 0, %s132
      %s149 = sphi 0, %s133
      %s155 = sphi 0, %s157
      %s158 = sphi 0, %s155
      %s159 = sphi 0, %s158
      %s175 = sphi 0, %s159
      %s181 = sphi 0, %s183
      %s184 = sphi 0, %s181
      %s185 = sphi 0, %s184
      %s201 = sphi 0, %s185
      %s207 = sphi 0, %s209
      %s210 = sphi 0, %s207
      %s211 = sphi 0, %s210
      %s227 = sphi 0, %s211
      %s233 = sphi 0, %s235
      %s236 = sphi 0, %s233
      %s237 = sphi 0, %s236
      %s253 = sphi 0, %s237
      %s259 = sphi 0, %s261
      %s262 = sphi 0, %s259
      %s263 = sphi 0, %s262
      %s279 = sphi 0, %s263
      %s285 = sphi 0, %s287
      %s288 = sphi 0, %s285
      %s289 = sphi 0, %s288
      %s305 = sphi 0, %s289
      %s311 = sphi 0, %s313
      %s314 = sphi 0, %s311
      %s315 = sphi 0, %s314
      %s331 = sphi 0, %s315
      %s353 = sphi 0, %s355
      %s356 = sphi 0, %s353
      %s357 = sphi 0, %s356
      %s373 = sphi 0, %s357
    $region4: #{tpu_custom_call.1} parent=1 // loop_header_branch
      %32 = sbr.rel (%p30) target = $region8
    $region5: #{tpu_custom_call.1} parent=1 // loop_body
      %s34 = ssub.s32 %s29, 1
      %s35 = ssub.s32 %s29, 2
      %s42 = sadd.s32 1, %s37
      %p43 = scmp.ge.s32.totalorder %s42, 4
      %s44 = scalar_select %p43, 0, %s42
      %s45 = sadd.s32 1, %s36
      %s46 = scalar_select %p43, %s45, %s36
      %p47 = scmp.ge.s32.totalorder %s46, 2
      %s48 = scalar_select %p47, 0, %s46
      %s49 = ssub.s32 %s36, %s48
      %p50 = scmp.eq.s32.totalorder %s49, 0
      %s52 = sadd.s32 %s51, 1
      %s53 = scalar_select %p50, %s51, %s52
      %p56 = pneg %p50
      %p57 = scmp.eq.s32.totalorder %s29, 7
      %p58 = por %p56, %p57
      %p59 = scmp.ne.s32.totalorder %s51, %s54
      %p60 = scmp.eq.s32.totalorder %s29, 0
      %p61 = por %p59, %p60
      %p62 = scmp.ne.s32.totalorder %s51, %s54
      %p63 = scmp.eq.s32.totalorder %s34, 7
      %p64 = por %p62, %p63
      %p65 = scmp.ne.s32.totalorder %s54, %s55
      %p66 = scmp.eq.s32.totalorder %s34, 0
      %p67 = por %p65, %p66
      %p68 = scmp.ne.s32.totalorder %s54, %s55
      %p69 = scmp.eq.s32.totalorder %s35, 7
      %p70 = por %p68, %p69
      %p72 = scmp.ne.s32.totalorder %s55, %s71
      %p73 = scmp.eq.s32.totalorder %s35, 0
      %p74 = por %p72, %p73
      %s75 = ssub.s32 %s37, %s44
      %p76 = scmp.eq.s32.totalorder %s75, 0
      %s78 = sadd.s32 %s77, 1
      %s79 = scalar_select %p76, %s77, %s78
      %p82 = pneg %p76
      %p83 = scmp.eq.s32.totalorder %s29, 7
      %p84 = por %p82, %p83
      %p85 = scmp.ne.s32.totalorder %s77, %s80
      %p86 = scmp.eq.s32.totalorder %s29, 0
      %p87 = por %p85, %p86
      %p88 = scmp.ne.s32.totalorder %s77, %s80
      %p89 = scmp.eq.s32.totalorder %s34, 7
      %p90 = por %p88, %p89
      %p91 = scmp.ne.s32.totalorder %s80, %s81
      %p92 = scmp.eq.s32.totalorder %s34, 0
      %p93 = por %p91, %p92
      %p94 = scmp.ne.s32.totalorder %s80, %s81
      %p95 = scmp.eq.s32.totalorder %s35, 7
      %p96 = por %p94, %p95
      %p98 = scmp.ne.s32.totalorder %s81, %s97
      %p99 = scmp.eq.s32.totalorder %s35, 0
      %p100 = por %p98, %p99
      %s101 = ssub.s32 %s37, %s44
      %p102 = scmp.eq.s32.totalorder %s101, 0
      %s104 = sadd.s32 %s103, 1
      %s105 = scalar_select %p102, %s103, %s104
      %p108 = pneg %p102
      %p109 = scmp.eq.s32.totalorder %s29, 7
      %p110 = por %p108, %p109
      %p111 = scmp.ne.s32.totalorder %s103, %s106
      %p112 = scmp.eq.s32.totalorder %s29, 0
      %p113 = por %p111, %p112
      %p114 = scmp.ne.s32.totalorder %s103, %s106
      %p115 = scmp.eq.s32.totalorder %s34, 7
      %p116 = por %p114, %p115
      %p117 = scmp.ne.s32.totalorder %s106, %s107
      %p118 = scmp.eq.s32.totalorder %s34, 0
      %p119 = por %p117, %p118
      %p120 = scmp.ne.s32.totalorder %s106, %s107
      %p121 = scmp.eq.s32.totalorder %s35, 7
      %p122 = por %p120, %p121
      %p124 = scmp.ne.s32.totalorder %s107, %s123
      %p125 = scmp.eq.s32.totalorder %s35, 0
      %p126 = por %p124, %p125
      %s127 = ssub.s32 %s37, %s44
      %p128 = scmp.eq.s32.totalorder %s127, 0
      %s130 = sadd.s32 %s129, 1
      %s131 = scalar_select %p128, %s129, %s130
      %p134 = pneg %p128
      %p135 = scmp.eq.s32.totalorder %s29, 7
      %p136 = por %p134, %p135
      %p137 = scmp.ne.s32.totalorder %s129, %s132
      %p138 = scmp.eq.s32.totalorder %s29, 0
      %p139 = por %p137, %p138
      %p140 = scmp.ne.s32.totalorder %s129, %s132
      %p141 = scmp.eq.s32.totalorder %s34, 7
      %p142 = por %p140, %p141
      %p143 = scmp.ne.s32.totalorder %s132, %s133
      %p144 = scmp.eq.s32.totalorder %s34, 0
      %p145 = por %p143, %p144
      %p146 = scmp.ne.s32.totalorder %s132, %s133
      %p147 = scmp.eq.s32.totalorder %s35, 7
      %p148 = por %p146, %p147
      %p150 = scmp.ne.s32.totalorder %s133, %s149
      %p151 = scmp.eq.s32.totalorder %s35, 0
      %p152 = por %p150, %p151
      %s153 = ssub.s32 %s37, %s44
      %p154 = scmp.eq.s32.totalorder %s153, 0
      %s156 = sadd.s32 %s155, 1
      %s157 = scalar_select %p154, %s155, %s156
      %p160 = pneg %p154
      %p161 = scmp.eq.s32.totalorder %s29, 7
      %p162 = por %p160, %p161
      %p163 = scmp.ne.s32.totalorder %s155, %s158
      %p164 = scmp.eq.s32.totalorder %s29, 0
      %p165 = por %p163, %p164
      %p166 = scmp.ne.s32.totalorder %s155, %s158
      %p167 = scmp.eq.s32.totalorder %s34, 7
      %p168 = por %p166, %p167
      %p169 = scmp.ne.s32.totalorder %s158, %s159
      %p170 = scmp.eq.s32.totalorder %s34, 0
      %p171 = por %p169, %p170
      %p172 = scmp.ne.s32.totalorder %s158, %s159
      %p173 = scmp.eq.s32.totalorder %s35, 7
      %p174 = por %p172, %p173
      %p176 = scmp.ne.s32.totalorder %s159, %s175
      %p177 = scmp.eq.s32.totalorder %s35, 0
      %p178 = por %p176, %p177
      %s179 = ssub.s32 %s37, %s44
      %p180 = scmp.eq.s32.totalorder %s179, 0
      %s182 = sadd.s32 %s181, 1
      %s183 = scalar_select %p180, %s181, %s182
      %p186 = pneg %p180
      %p187 = scmp.eq.s32.totalorder %s29, 7
      %p188 = por %p186, %p187
      %p189 = scmp.ne.s32.totalorder %s181, %s184
      %p190 = scmp.eq.s32.totalorder %s29, 0
      %p191 = por %p189, %p190
      %p192 = scmp.ne.s32.totalorder %s181, %s184
      %p193 = scmp.eq.s32.totalorder %s34, 7
      %p194 = por %p192, %p193
      %p195 = scmp.ne.s32.totalorder %s184, %s185
      %p196 = scmp.eq.s32.totalorder %s34, 0
      %p197 = por %p195, %p196
      %p198 = scmp.ne.s32.totalorder %s184, %s185
      %p199 = scmp.eq.s32.totalorder %s35, 7
      %p200 = por %p198, %p199
      %p202 = scmp.ne.s32.totalorder %s185, %s201
      %p203 = scmp.eq.s32.totalorder %s35, 0
      %p204 = por %p202, %p203
      %s205 = ssub.s32 %s37, %s44
      %p206 = scmp.eq.s32.totalorder %s205, 0
      %s208 = sadd.s32 %s207, 1
      %s209 = scalar_select %p206, %s207, %s208
      %p212 = pneg %p206
      %p213 = scmp.eq.s32.totalorder %s29, 7
      %p214 = por %p212, %p213
      %p215 = scmp.ne.s32.totalorder %s207, %s210
      %p216 = scmp.eq.s32.totalorder %s29, 0
      %p217 = por %p215, %p216
      %p218 = scmp.ne.s32.totalorder %s207, %s210
      %p219 = scmp.eq.s32.totalorder %s34, 7
      %p220 = por %p218, %p219
      %p221 = scmp.ne.s32.totalorder %s210, %s211
      %p222 = scmp.eq.s32.totalorder %s34, 0
      %p223 = por %p221, %p222
      %p224 = scmp.ne.s32.totalorder %s210, %s211
      %p225 = scmp.eq.s32.totalorder %s35, 7
      %p226 = por %p224, %p225
      %p228 = scmp.ne.s32.totalorder %s211, %s227
      %p229 = scmp.eq.s32.totalorder %s35, 0
      %p230 = por %p228, %p229
      %s231 = ssub.s32 %s37, %s44
      %p232 = scmp.eq.s32.totalorder %s231, 0
      %s234 = sadd.s32 %s233, 1
      %s235 = scalar_select %p232, %s233, %s234
      %p238 = pneg %p232
      %p239 = scmp.eq.s32.totalorder %s29, 7
      %p240 = por %p238, %p239
      %p241 = scmp.ne.s32.totalorder %s233, %s236
      %p242 = scmp.eq.s32.totalorder %s29, 0
      %p243 = por %p241, %p242
      %p244 = scmp.ne.s32.totalorder %s233, %s236
      %p245 = scmp.eq.s32.totalorder %s34, 7
      %p246 = por %p244, %p245
      %p247 = scmp.ne.s32.totalorder %s236, %s237
      %p248 = scmp.eq.s32.totalorder %s34, 0
      %p249 = por %p247, %p248
      %p250 = scmp.ne.s32.totalorder %s236, %s237
      %p251 = scmp.eq.s32.totalorder %s35, 7
      %p252 = por %p250, %p251
      %p254 = scmp.ne.s32.totalorder %s237, %s253
      %p255 = scmp.eq.s32.totalorder %s35, 0
      %p256 = por %p254, %p255
      %s257 = ssub.s32 %s37, %s44
      %p258 = scmp.eq.s32.totalorder %s257, 0
      %s260 = sadd.s32 %s259, 1
      %s261 = scalar_select %p258, %s259, %s260
      %p264 = pneg %p258
      %p265 = scmp.eq.s32.totalorder %s29, 7
      %p266 = por %p264, %p265
      %p267 = scmp.ne.s32.totalorder %s259, %s262
      %p268 = scmp.eq.s32.totalorder %s29, 0
      %p269 = por %p267, %p268
      %p270 = scmp.ne.s32.totalorder %s259, %s262
      %p271 = scmp.eq.s32.totalorder %s34, 7
      %p272 = por %p270, %p271
      %p273 = scmp.ne.s32.totalorder %s262, %s263
      %p274 = scmp.eq.s32.totalorder %s34, 0
      %p275 = por %p273, %p274
      %p276 = scmp.ne.s32.totalorder %s262, %s263
      %p277 = scmp.eq.s32.totalorder %s35, 7
      %p278 = por %p276, %p277
      %p280 = scmp.ne.s32.totalorder %s263, %s279
      %p281 = scmp.eq.s32.totalorder %s35, 0
      %p282 = por %p280, %p281
      %s283 = ssub.s32 %s37, %s44
      %p284 = scmp.eq.s32.totalorder %s283, 0
      %s286 = sadd.s32 %s285, 1
      %s287 = scalar_select %p284, %s285, %s286
      %p290 = pneg %p284
      %p291 = scmp.eq.s32.totalorder %s29, 7
      %p292 = por %p290, %p291
      %p293 = scmp.ne.s32.totalorder %s285, %s288
      %p294 = scmp.eq.s32.totalorder %s29, 0
      %p295 = por %p293, %p294
      %p296 = scmp.ne.s32.totalorder %s285, %s288
      %p297 = scmp.eq.s32.totalorder %s34, 7
      %p298 = por %p296, %p297
      %p299 = scmp.ne.s32.totalorder %s288, %s289
      %p300 = scmp.eq.s32.totalorder %s34, 0
      %p301 = por %p299, %p300
      %p302 = scmp.ne.s32.totalorder %s288, %s289
      %p303 = scmp.eq.s32.totalorder %s35, 7
      %p304 = por %p302, %p303
      %p306 = scmp.ne.s32.totalorder %s289, %s305
      %p307 = scmp.eq.s32.totalorder %s35, 0
      %p308 = por %p306, %p307
      %s309 = ssub.s32 %s37, %s44
      %p310 = scmp.eq.s32.totalorder %s309, 0
      %s312 = sadd.s32 %s311, 1
      %s313 = scalar_select %p310, %s311, %s312
      %p316 = pneg %p310
      %p317 = scmp.eq.s32.totalorder %s29, 7
      %p318 = por %p316, %p317
      %p319 = scmp.ne.s32.totalorder %s311, %s314
      %p320 = scmp.eq.s32.totalorder %s29, 0
      %p321 = por %p319, %p320
      %p322 = scmp.ne.s32.totalorder %s311, %s314
      %p323 = scmp.eq.s32.totalorder %s34, 7
      %p324 = por %p322, %p323
      %p325 = scmp.ne.s32.totalorder %s314, %s315
      %p326 = scmp.eq.s32.totalorder %s34, 0
      %p327 = por %p325, %p326
      %p328 = scmp.ne.s32.totalorder %s314, %s315
      %p329 = scmp.eq.s32.totalorder %s35, 7
      %p330 = por %p328, %p329
      %p332 = scmp.ne.s32.totalorder %s315, %s331
      %p333 = scmp.eq.s32.totalorder %s35, 0
      %p334 = por %p332, %p333
      %p335 = scmp.ge.s32.totalorder %s37, 2
      %s336 = scalar_select %p335, 1, 0
      %p337 = scmp.ge.s32.totalorder %s37, 4
      %s338 = scalar_select %p337, 1, 0
      %s339 = sadd.s32 %s336, %s338
      %p340 = scmp.lt.s32.totalorder %s339, 1
      %s341 = scalar_select %p340, %s339, 1
      %p342 = scmp.ge.s32.totalorder %s44, 2
      %s343 = scalar_select %p342, 1, 0
      %p344 = scmp.ge.s32.totalorder %s44, 4
      %s345 = scalar_select %p344, 1, 0
      %s346 = sadd.s32 %s343, %s345
      %p347 = scmp.lt.s32.totalorder %s346, 1
      %s348 = scalar_select %p347, %s346, 1
      %s349 = ssub.s32 %s341, %s348
      %s350 = ssub.s32 %s36, %s48
      %s351 = sor.u32 %s349, %s350
      %p352 = scmp.eq.s32.totalorder %s351, 0
      %s354 = sadd.s32 %s353, 1
      %s355 = scalar_select %p352, %s353, %s354
      %p358 = pneg %p352
      %p359 = scmp.eq.s32.totalorder %s29, 7
      %p360 = por %p358, %p359
      %p361 = scmp.ne.s32.totalorder %s353, %s356
      %p362 = scmp.eq.s32.totalorder %s29, 0
      %p363 = por %p361, %p362
      %p364 = scmp.ne.s32.totalorder %s353, %s356
      %p365 = scmp.eq.s32.totalorder %s34, 7
      %p366 = por %p364, %p365
      %p367 = scmp.ne.s32.totalorder %s356, %s357
      %p368 = scmp.eq.s32.totalorder %s34, 0
      %p369 = por %p367, %p368
      %p370 = scmp.ne.s32.totalorder %s356, %s357
      %p371 = scmp.eq.s32.totalorder %s35, 7
      %p372 = por %p370, %p371
      %p374 = scmp.ne.s32.totalorder %s357, %s373
      %p375 = scmp.eq.s32.totalorder %s35, 0
      %p376 = por %p374, %p375
      %p377 = scmp.le.s32.totalorder 1, %s29
      %p378 = scmp.lt.s32.totalorder %s29, 9
      %p379 = pnand %p377, %p378
      %p380 = pneg %p379
      // Predicated region
      $region9: #{tpu_custom_call.1} parent=5 // pred_check
        _
      $region10: #{tpu_custom_call.1} parent=5 // pred_check_branch
        %382 = sbr.rel (%p379) target = $region12
      $region11: #{tpu_custom_call.1} parent=5 // pred_region
        %s383 = ssub.s32 %s29, 1
      $region12: #{tpu_custom_call.1} parent=5 // pred_fallthru
        _
      %p384 = scmp.lt.s32.totalorder %s29, 8
      // Predicated region
      $region13: #{tpu_custom_call.1} parent=5 // pred_check
        %p385 = pneg %p384
      $region14: #{tpu_custom_call.1} parent=5 // pred_check_branch
        %387 = sbr.rel (%p385) target = $region16
      $region15: #{tpu_custom_call.1} parent=5 // pred_region
        // Predicated region
        $region17: #{tpu_custom_call.1} parent=15 // pred_check
          %p388 = pneg %p61
        $region18: #{tpu_custom_call.1} parent=15 // pred_check_branch
          %390 = sbr.rel (%p388) target = $region20
        $region19: #{tpu_custom_call.1} parent=15 // pred_region
          %s391 = sand.u32 %s51, 1
          %s392 = scalar_lea.sflag [#allocation4], %s391
          %s393 = sand.u32 %s51, 1
          %s394 = smul.addr %s393, 8
          %s395 = scalar_lea.vmem [#allocation3], %s394
          %397 = vsyncadd %s392, 0
          %s398 = smul.addr %s36, 8
          %s399 = scalar_lea.hbm %s0, %s398
          %s401 = sshll.u32 %s399, 4
          %s402 = int_to_ptr.hbm [resolvable:$true] %s401
          %s403 = sshll.u32 %s395, 4
          %s404 = int_to_ptr.vmem [resolvable:$true] %s403
          %406 = dma.hbm_to_vmem [thread:$0]  %s402, 128, %s404, %s392
        $region20: #{tpu_custom_call.1} parent=15 // pred_fallthru
          _
        // Predicated region
        $region21: #{tpu_custom_call.1} parent=15 // pred_check
          %p407 = pneg %p87
        $region22: #{tpu_custom_call.1} parent=15 // pred_check_branch
          %409 = sbr.rel (%p407) target = $region24
        $region23: #{tpu_custom_call.1} parent=15 // pred_region
          %s410 = sand.u32 %s29, 1
          %s411 = scalar_lea.sflag [#allocation7], %s410
          %s412 = sand.u32 %s77, 1
          %s413 = scalar_lea.vmem [#allocation6], %s412
          %415 = vsyncadd %s411, 0
          %s416 = scalar_lea.hbm %s1, %s37
          %s418 = sshll.u32 %s416, 4
          %s419 = int_to_ptr.hbm [resolvable:$true] %s418
          %s420 = sshll.u32 %s413, 4
          %s421 = int_to_ptr.vmem [resolvable:$true] %s420
          %423 = dma.hbm_to_vmem [thread:$0]  %s419, 16, %s421, %s411
        $region24: #{tpu_custom_call.1} parent=15 // pred_fallthru
          _
        // Predicated region
        $region25: #{tpu_custom_call.1} parent=15 // pred_check
          %p424 = pneg %p113
        $region26: #{tpu_custom_call.1} parent=15 // pred_check_branch
          %426 = sbr.rel (%p424) target = $region28
        $region27: #{tpu_custom_call.1} parent=15 // pred_region
          %s427 = sand.u32 %s29, 1
          %s428 = scalar_lea.sflag [#allocation7], %s427
          %s429 = sand.u32 %s103, 1
          %s430 = scalar_lea.vmem [#allocation8], %s429
          %432 = vsyncadd %s428, 0
          %s433 = scalar_lea.hbm %s2, %s37
          %s435 = sshll.u32 %s433, 4
          %s436 = int_to_ptr.hbm [resolvable:$true] %s435
          %s437 = sshll.u32 %s430, 4
          %s438 = int_to_ptr.vmem [resolvable:$true] %s437
          %440 = dma.hbm_to_vmem [thread:$0]  %s436, 16, %s438, %s428
        $region28: #{tpu_custom_call.1} parent=15 // pred_fallthru
          _
        // Predicated region
        $region29: #{tpu_custom_call.1} parent=15 // pred_check
          %p441 = pneg %p139
        $region30: #{tpu_custom_call.1} parent=15 // pred_check_branch
          %443 = sbr.rel (%p441) target = $region32
        $region31: #{tpu_custom_call.1} parent=15 // pred_region
          %p444 = scmp.lt.s32.totalorder %s37, 3
          %s445 = scalar_select %p444, %s37, 3
          %s446 = smul.addr %s445, 4
          %s447 = smul.addr %s446, 4
          %s448 = scalar_lea.vmem %s3, %s447
        $region32: #{tpu_custom_call.1} parent=15 // pred_fallthru
          _
        // Predicated region
        $region33: #{tpu_custom_call.1} parent=15 // pred_check
          %p449 = pneg %p165
        $region34: #{tpu_custom_call.1} parent=15 // pred_check_branch
          %451 = sbr.rel (%p449) target = $region36
        $region35: #{tpu_custom_call.1} parent=15 // pred_region
          %p452 = scmp.lt.s32.totalorder %s37, 3
          %s453 = scalar_select %p452, %s37, 3
          %s454 = smul.addr %s453, 4
          %s455 = smul.addr %s454, 4
          %s456 = scalar_lea.vmem %s4, %s455
        $region36: #{tpu_custom_call.1} parent=15 // pred_fallthru
          _
        // Predicated region
        $region37: #{tpu_custom_call.1} parent=15 // pred_check
          %p457 = pneg %p191
        $region38: #{tpu_custom_call.1} parent=15 // pred_check_branch
          %459 = sbr.rel (%p457) target = $region40
        $region39: #{tpu_custom_call.1} parent=15 // pred_region
          %s460 = sand.u32 %s29, 1
          %s461 = scalar_lea.sflag [#allocation10], %s460
          %s462 = sand.u32 %s181, 1
          %s463 = scalar_lea.vmem [#allocation9], %s462
          %465 = vsyncadd %s461, 0
          %s466 = scalar_lea.hbm %s5, %s37
          %s468 = sshll.u32 %s466, 4
          %s469 = int_to_ptr.hbm [resolvable:$true] %s468
          %s470 = sshll.u32 %s463, 4
          %s471 = int_to_ptr.vmem [resolvable:$true] %s470
          %473 = dma.hbm_to_vmem [thread:$0]  %s469, 16, %s471, %s461
        $region40: #{tpu_custom_call.1} parent=15 // pred_fallthru
          _
        // Predicated region
        $region41: #{tpu_custom_call.1} parent=15 // pred_check
          %p474 = pneg %p217
        $region42: #{tpu_custom_call.1} parent=15 // pred_check_branch
          %476 = sbr.rel (%p474) target = $region44
        $region43: #{tpu_custom_call.1} parent=15 // pred_region
          %p477 = scmp.lt.s32.totalorder %s37, 3
          %s478 = scalar_select %p477, %s37, 3
          %s479 = scalar_lea.vmem %s6, %s478
        $region44: #{tpu_custom_call.1} parent=15 // pred_fallthru
          _
        // Predicated region
        $region45: #{tpu_custom_call.1} parent=15 // pred_check
          %p480 = pneg %p243
        $region46: #{tpu_custom_call.1} parent=15 // pred_check_branch
          %482 = sbr.rel (%p480) target = $region48
        $region47: #{tpu_custom_call.1} parent=15 // pred_region
          %p483 = scmp.lt.s32.totalorder %s37, 3
          %s484 = scalar_select %p483, %s37, 3
          %s485 = smul.addr %s484, 4
          %s486 = smul.addr %s485, 4
          %s487 = scalar_lea.vmem %s7, %s486
        $region48: #{tpu_custom_call.1} parent=15 // pred_fallthru
          _
        // Predicated region
        $region49: #{tpu_custom_call.1} parent=15 // pred_check
          %p488 = pneg %p269
        $region50: #{tpu_custom_call.1} parent=15 // pred_check_branch
          %490 = sbr.rel (%p488) target = $region52
        $region51: #{tpu_custom_call.1} parent=15 // pred_region
          %s491 = sand.u32 %s29, 1
          %s492 = scalar_lea.sflag [#allocation10], %s491
          %s493 = sand.u32 %s259, 1
          %s494 = scalar_lea.vmem [#allocation11], %s493
          %496 = vsyncadd %s492, 0
          %s497 = scalar_lea.hbm %s8, %s37
          %s499 = sshll.u32 %s497, 4
          %s500 = int_to_ptr.hbm [resolvable:$true] %s499
          %s501 = sshll.u32 %s494, 4
          %s502 = int_to_ptr.vmem [resolvable:$true] %s501
          %504 = dma.hbm_to_vmem [thread:$0]  %s500, 16, %s502, %s492
        $region52: #{tpu_custom_call.1} parent=15 // pred_fallthru
          _
        // Predicated region
        $region53: #{tpu_custom_call.1} parent=15 // pred_check
          %p505 = pneg %p295
        $region54: #{tpu_custom_call.1} parent=15 // pred_check_branch
          %507 = sbr.rel (%p505) target = $region56
        $region55: #{tpu_custom_call.1} parent=15 // pred_region
          %p508 = scmp.lt.s32.totalorder %s37, 3
          %s509 = scalar_select %p508, %s37, 3
          %s510 = smul.addr %s509, 8
          %s511 = smul.addr %s510, 4
          %s512 = scalar_lea.vmem %s9, %s511
        $region56: #{tpu_custom_call.1} parent=15 // pred_fallthru
          _
        // Predicated region
        $region57: #{tpu_custom_call.1} parent=15 // pred_check
          %p513 = pneg %p321
        $region58: #{tpu_custom_call.1} parent=15 // pred_check_branch
          %515 = sbr.rel (%p513) target = $region60
        $region59: #{tpu_custom_call.1} parent=15 // pred_region
          %p516 = scmp.lt.s32.totalorder %s37, 3
          %s517 = scalar_select %p516, %s37, 3
          %s518 = scalar_lea.vmem %s10, %s517
        $region60: #{tpu_custom_call.1} parent=15 // pred_fallthru
          _
      $region16: #{tpu_custom_call.1} parent=5 // pred_fallthru
        _
      %p519 = scmp.le.s32.totalorder 1, %s29
      %p520 = scmp.lt.s32.totalorder %s29, 9
      %p521 = pnand %p519, %p520
      %p522 = pneg %p521
      // Predicated region
      $region61: #{tpu_custom_call.1} parent=5 // pred_check
        _
      $region62: #{tpu_custom_call.1} parent=5 // pred_check_branch
        %524 = sbr.rel (%p521) target = $region64
      $region63: #{tpu_custom_call.1} parent=5 // pred_region
        %s525 = ssub.s32 %s29, 1
        %s526 = sand.u32 %s54, 1
        %s527 = scalar_lea.sflag [#allocation4], %s526
        %s528 = sand.u32 %s54, 1
        %s529 = smul.addr %s528, 8
        %s530 = scalar_lea.vmem [#allocation3], %s529
        // Predicated region
        $region65: #{tpu_custom_call.1} parent=63 // pred_check
          %p531 = pneg %p67
        $region66: #{tpu_custom_call.1} parent=63 // pred_check_branch
          %533 = sbr.rel (%p531) target = $region68
        $region67: #{tpu_custom_call.1} parent=63 // pred_region
          %535 = dma.done %s527, 128
        $region68: #{tpu_custom_call.1} parent=63 // pred_fallthru
          _
        %s536 = sand.u32 %s34, 1
        %s537 = scalar_lea.sflag [#allocation7], %s536
        %s538 = sand.u32 %s80, 1
        %s539 = scalar_lea.vmem [#allocation6], %s538
        // Predicated region
        $region69: #{tpu_custom_call.1} parent=63 // pred_check
          %p540 = pneg %p93
        $region70: #{tpu_custom_call.1} parent=63 // pred_check_branch
          %542 = sbr.rel (%p540) target = $region72
        $region71: #{tpu_custom_call.1} parent=63 // pred_region
          %544 = dma.done %s537, 16
        $region72: #{tpu_custom_call.1} parent=63 // pred_fallthru
          _
        %s545 = sand.u32 %s34, 1
        %s546 = scalar_lea.sflag [#allocation7], %s545
        %s547 = sand.u32 %s106, 1
        %s548 = scalar_lea.vmem [#allocation8], %s547
        // Predicated region
        $region73: #{tpu_custom_call.1} parent=63 // pred_check
          %p549 = pneg %p119
        $region74: #{tpu_custom_call.1} parent=63 // pred_check_branch
          %551 = sbr.rel (%p549) target = $region76
        $region75: #{tpu_custom_call.1} parent=63 // pred_region
          %553 = dma.done %s546, 16
        $region76: #{tpu_custom_call.1} parent=63 // pred_fallthru
          _
        %s554 = sand.u32 %s34, 1
        %s555 = scalar_lea.sflag [#allocation10], %s554
        %s556 = sand.u32 %s184, 1
        %s557 = scalar_lea.vmem [#allocation9], %s556
        // Predicated region
        $region77: #{tpu_custom_call.1} parent=63 // pred_check
          %p558 = pneg %p197
        $region78: #{tpu_custom_call.1} parent=63 // pred_check_branch
          %560 = sbr.rel (%p558) target = $region80
        $region79: #{tpu_custom_call.1} parent=63 // pred_region
          %562 = dma.done %s555, 16
        $region80: #{tpu_custom_call.1} parent=63 // pred_fallthru
          _
        %s563 = sand.u32 %s34, 1
        %s564 = scalar_lea.sflag [#allocation10], %s563
        %s565 = sand.u32 %s262, 1
        %s566 = scalar_lea.vmem [#allocation11], %s565
        // Predicated region
        $region81: #{tpu_custom_call.1} parent=63 // pred_check
          %p567 = pneg %p275
        $region82: #{tpu_custom_call.1} parent=63 // pred_check_branch
          %569 = sbr.rel (%p567) target = $region84
        $region83: #{tpu_custom_call.1} parent=63 // pred_region
          %571 = dma.done %s564, 16
        $region84: #{tpu_custom_call.1} parent=63 // pred_fallthru
          _
        %s572 = sand.u32 %s54, 1
        %s573 = scalar_lea.sflag [#allocation4], %s572
        %s574 = sand.u32 %s54, 1
        %s575 = smul.addr %s574, 8
        %s576 = scalar_lea.vmem [#allocation3], %s575
        %p577 = pneg %p67
        %p578 = pneg %p64
        %s579 = sand.u32 %s34, 1
        %s580 = scalar_lea.sflag [#allocation7], %s579
        %s581 = sand.u32 %s80, 1
        %s582 = scalar_lea.vmem [#allocation6], %s581
        %p583 = pneg %p93
        %p584 = pneg %p90
        %s585 = sand.u32 %s34, 1
        %s586 = scalar_lea.sflag [#allocation7], %s585
        %s587 = sand.u32 %s106, 1
        %s588 = scalar_lea.vmem [#allocation8], %s587
        %p589 = pneg %p119
        %p590 = pneg %p116
        %p591 = scmp.lt.s32.totalorder %s39, 3
        %s592 = scalar_select %p591, %s39, 3
        %s593 = smul.addr %s592, 4
        %s594 = smul.addr %s593, 4
        %s595 = scalar_lea.vmem %s3, %s594
        %p596 = pneg %p145
        %p597 = pneg %p142
        %p598 = scmp.lt.s32.totalorder %s39, 3
        %s599 = scalar_select %p598, %s39, 3
        %s600 = smul.addr %s599, 4
        %s601 = smul.addr %s600, 4
        %s602 = scalar_lea.vmem %s4, %s601
        %p603 = pneg %p171
        %p604 = pneg %p168
        %s605 = sand.u32 %s34, 1
        %s606 = scalar_lea.sflag [#allocation10], %s605
        %s607 = sand.u32 %s184, 1
        %s608 = scalar_lea.vmem [#allocation9], %s607
        %p609 = pneg %p197
        %p610 = pneg %p194
        %p611 = scmp.lt.s32.totalorder %s39, 3
        %s612 = scalar_select %p611, %s39, 3
        %s613 = scalar_lea.vmem %s6, %s612
        %p614 = pneg %p223
        %p615 = pneg %p220
        %p616 = scmp.lt.s32.totalorder %s39, 3
        %s617 = scalar_select %p616, %s39, 3
        %s618 = smul.addr %s617, 4
        %s619 = smul.addr %s618, 4
        %s620 = scalar_lea.vmem %s7, %s619
        %p621 = pneg %p249
        %p622 = pneg %p246
        %s623 = sand.u32 %s34, 1
        %s624 = scalar_lea.sflag [#allocation10], %s623
        %s625 = sand.u32 %s262, 1
        %s626 = scalar_lea.vmem [#allocation11], %s625
        %p627 = pneg %p275
        %p628 = pneg %p272
        %p629 = scmp.lt.s32.totalorder %s39, 3
        %s630 = scalar_select %p629, %s39, 3
        %s631 = smul.addr %s630, 8
        %s632 = smul.addr %s631, 4
        %s633 = scalar_lea.vmem %s9, %s632
        %p634 = pneg %p301
        %p635 = pneg %p298
        %p636 = scmp.lt.s32.totalorder %s39, 3
        %s637 = scalar_select %p636, %s39, 3
        %s638 = scalar_lea.vmem %s10, %s637
        %p639 = pneg %p327
        %p640 = pneg %p324
        %p641 = pneg %p369
        %p642 = pneg %p366
        %s643 = sand.u32 %s356, 1
        %s644 = scalar_lea.sflag [#allocation5], %s643
        %s645 = sand.u32 %s356, 1
        %s646 = smul.addr %s645, 8
        %s647 = scalar_lea.vmem [#allocation12], %s646
        %p648 = scmp.lt.s32.totalorder %s39, 3
        %s649 = scalar_select %p648, %s39, 3
        %s650 = smul.addr %s649, 4
        %s651 = smul.addr %s650, 4
        %s652 = scalar_lea.vmem %s3, %s651
        %p653 = scmp.lt.s32.totalorder %s39, 3
        %s654 = scalar_select %p653, %s39, 3
        %s655 = smul.addr %s654, 4
        %s656 = smul.addr %s655, 4
        %s657 = scalar_lea.vmem %s4, %s656
        %p658 = scmp.lt.s32.totalorder %s39, 3
        %s659 = scalar_select %p658, %s39, 3
        %s660 = scalar_lea.vmem %s6, %s659
        %p661 = scmp.lt.s32.totalorder %s39, 3
        %s662 = scalar_select %p661, %s39, 3
        %s663 = smul.addr %s662, 4
        %s664 = smul.addr %s663, 4
        %s665 = scalar_lea.vmem %s7, %s664
        %p666 = scmp.lt.s32.totalorder %s39, 3
        %s667 = scalar_select %p666, %s39, 3
        %s668 = smul.addr %s667, 8
        %s669 = smul.addr %s668, 4
        %s670 = scalar_lea.vmem %s9, %s669
        %p671 = scmp.lt.s32.totalorder %s39, 3
        %s672 = scalar_select %p671, %s39, 3
        %s673 = scalar_lea.vmem %s10, %s672
        %p674 = scmp.ge.s32.totalorder %s39, 2
        %s675 = scalar_select %p674, 1, 0
        %p676 = scmp.ge.s32.totalorder %s39, 4
        %s677 = scalar_select %p676, 1, 0
        %s678 = sadd.s32 %s675, %s677
        %p679 = scmp.lt.s32.totalorder %s678, 1
        %s680 = scalar_select %p679, %s678, 1
        %p682 = scmp.eq.s32.totalorder %s39, 0
        // Predicated region
        $region85: #{tpu_custom_call.1} parent=63 // pred_check
          %p683 = pneg %p682
        $region86: #{tpu_custom_call.1} parent=63 // pred_check_branch
          %685 = sbr.rel (%p683) target = $region88
        $region87: #{tpu_custom_call.1} parent=63 // pred_region
          %v686 = vld [vmem:[%s530] sm:$0xff]
          %vm687 = vcmask 261120
          %688 = vst.msk [vmem:[#allocation2] sm:$0xff] %vm687, %v686
        $region88: #{tpu_custom_call.1} parent=63 // pred_fallthru
          _
        %v689 = vld [vmem:[#allocation2] sm:$0xff]
        %vm690 = vcmask 261120
        %v691 = vsel %vm690, %v689, 0.0
        %692 = vadd.xlane.f32.xlu0 %v691
        %v693 = vpop.xlane.xlu0 %692
        %v694 = vrcp.pop 32.0
        %v695 = vmul.f32 32.0, %v694
        %v696 = vsub.f32 1.0, %v695
        %v697 = vmul.f32 %v694, %v696
        %v698 = vadd.f32 %v694, %v697
        %vm699 = vweird.f32 %v694
        %v700 = vsel %vm699, %v694, %v698
        %v701 = vmul.f32 %v693, %v700
        %v702 = vsub.f32 %v689, %v701
        %v703 = vmul.f32 %v702, %v702
        %v704 = vsel %vm690, %v703, 0.0
        %705 = vadd.xlane.f32.xlu0 %v704
        %v706 = vpop.xlane.xlu0 %705
        %v707 = vmul.f32 %v706, %v700
        %v708 = vadd.f32 %v707, 1e-05
        %v709 = vrsqrt.pop %v708
        %v710 = vmul.f32 %v709, %v708
        %v711 = vmul.f32 %v710, %v709
        %v712 = vmul.f32 0.5, %v711
        %v713 = vsub.f32 1.5, %v712
        %v714 = vmul.f32 %v709, %v713
        %vm715 = vweird.f32 %v708
        %vm716 = vweird.f32 %v709
        %vm717 = vmor %vm715, %vm716
        %v718 = vsel %vm717, %v709, %v714
        %v719 = vmul.f32 %v702, %v718
        %v720 = vld [vmem:[%s539] sm:$0x1]
        %v722 = vperm.slane %v720, 0
        %v724 = vmul.f32 %v719, %v722
        %v725 = vld [vmem:[%s548] sm:$0x1]
        %v727 = vperm.slane %v725, 0
        %v729 = vadd.f32 %v724, %v727
        %v730 = vld [vmem:[%s652] sm:$0xf]
        %v731 = vld [vmem:[%s652 + $0x4] sm:$0xf]
        %v732 = vld [vmem:[%s652 + $0x8] sm:$0xf]
        %v733 = vld [vmem:[%s652 + $0xc] sm:$0xf]
        %v734 = vpack.c.bf16 %v729, %v729
        %v739 = vunpack.c.l.b16 %v730
        %v740 = vunpack.c.l.b16 %v731
        %v741 = vunpack.c.l.b16 %v732
        %v742 = vunpack.c.l.b16 %v733
        %v743 = vpack.c.b16 %v740, %v739
        %v744 = vpack.c.b16 %v742, %v741
        %v748 = vsel %vm690, %v734, 0
        %750 = vmatpush.bf16.msra.mxu0 0
        %751 = vmatpush.bf16.msra.mxu0 0
        %752 = vmatpush.bf16.msra.mxu0 0
        %753 = vmatpush.bf16.msra.mxu0 0
        %754 = vmatpush.bf16.msra.mxu0 0
        %755 = vmatpush.bf16.msra.mxu0 0
        %756 = vmatpush.bf16.msra.mxu0 %v744
        %757 = vmatpush.bf16.msra.mxu0 %v743
        %758 = vmatmul.bf16.gmra.mxu0 %v748
        %v759 = vpop.f32.mrf.mxu0
        %v760 = vadd.f32 0.0, %v759
        %v761 = vpop.f32.mrf.mxu0
        %762 = vdwg.mxu0
        %v763 = vpack.c.bf16 %v760, %v760
        %765 = vrot.lane.b32.xlu0 %v763, 96
        %v766 = vpop.permute.xlu0 %765
        %vm767 = vcmask 64512
        %v769 = vsel %vm767, %v763, 0
        %v772 = vsel %vm767, %v766, 0
        %774 = vmatpush.bf16.xpose.msra.mxu0 0
        %775 = vmatpush.bf16.xpose.msra.mxu0 0
        %776 = vmatpush.bf16.xpose.msra.mxu0 0
        %777 = vmatpush.bf16.xpose.msra.mxu0 0
        %778 = vmatpush.bf16.xpose.msra.mxu0 0
        %779 = vmatpush.bf16.xpose.msra.mxu0 0
        %780 = vmatpush.bf16.xpose.msra.mxu0 0
        %781 = vmatpush.bf16.xpose.msra.mxu0 %v772
        %782 = vmatmul.bf16.gmra.mxu0 %v769
        %v783 = vpop.f32.mrf.mxu0
        %v784 = vadd.f32 0.0, %v783
        %v785 = vpop.f32.mrf.mxu0
        %786 = vdwg.mxu0
        %v787 = vmul.f32 %v784, 0.35355338
        %v788 = vsel %vm767, %v787, -inf
        %789 = vmax.xlane.f32.xlu0 %v788
        %v790 = vpop.xlane.xlu0 %789
        %v791 = vsub.f32 %v787, %v790
        %v792 = vmul.f32 %v791, 1.442695
        %v793 = vpow.pop %v792
        %v794 = vsel %vm767, %v793, 0.0
        %795 = vadd.xlane.f32.xlu0 %v794
        %v796 = vpop.xlane.xlu0 %795
        %v797 = vrcp.pop %v796
        %v798 = vmul.f32 %v796, %v797
        %v799 = vsub.f32 1.0, %v798
        %v800 = vmul.f32 %v797, %v799
        %v801 = vadd.f32 %v797, %v800
        %vm802 = vweird.f32 %v796
        %vm803 = vweird.f32 %v797
        %vm804 = vmor %vm802, %vm803
        %v805 = vsel %vm804, %v797, %v801
        %v806 = vand.u32 2147483647, %v796
        %vm807 = vcmp.eq.f32.partialorder %v806, 8.507059e+37
        %v808 = vand.u32 %v796, 2147483648
        %v809 = vor.u32 1.1754944e-38, %v808
        %v810 = vsel %vm807, %v809, %v805
        %v811 = vmul.f32 %v793, %v810
        %v812 = vpack.c.bf16 %v811, %v811
        %813 = vrot.lane.b32.xlu0 %v763, 64
        %v814 = vpop.permute.xlu0 %813
        %v816 = vsel %vm767, %v812, 0
        %vm818 = vcmask 1043456
        %v820 = vsel %vm818, %v814, 0
        %822 = vmatpush.bf16.msra.mxu0 0
        %823 = vmatpush.bf16.msra.mxu0 0
        %824 = vmatpush.bf16.msra.mxu0 0
        %825 = vmatpush.bf16.msra.mxu0 0
        %826 = vmatpush.bf16.msra.mxu0 0
        %827 = vmatpush.bf16.msra.mxu0 0
        %828 = vmatpush.bf16.msra.mxu0 0
        %829 = vmatpush.bf16.msra.mxu0 %v820
        %830 = vmatmul.bf16.gmra.mxu0 %v816
        %v831 = vpop.f32.mrf.mxu0
        %v832 = vadd.f32 0.0, %v831
        %v833 = vpop.f32.mrf.mxu0
        %834 = vdwg.mxu0
        %835 = vrot.lane.b32.xlu0 %v763, 120
        %v836 = vpop.permute.xlu0 %835
        %837 = vrot.lane.b32.xlu0 %v763, 88
        %v838 = vpop.permute.xlu0 %837
        %v840 = vsel %vm767, %v836, 0
        %v843 = vsel %vm767, %v838, 0
        %845 = vmatpush.bf16.xpose.msra.mxu0 0
        %846 = vmatpush.bf16.xpose.msra.mxu0 0
        %847 = vmatpush.bf16.xpose.msra.mxu0 0
        %848 = vmatpush.bf16.xpose.msra.mxu0 0
        %849 = vmatpush.bf16.xpose.msra.mxu0 0
        %850 = vmatpush.bf16.xpose.msra.mxu0 0
        %851 = vmatpush.bf16.xpose.msra.mxu0 0
        %852 = vmatpush.bf16.xpose.msra.mxu0 %v843
        %853 = vmatmul.bf16.gmra.mxu0 %v840
        %v854 = vpop.f32.mrf.mxu0
        %v855 = vadd.f32 0.0, %v854
        %v856 = vpop.f32.mrf.mxu0
        %857 = vdwg.mxu0
        %v858 = vmul.f32 %v855, 0.35355338
        %v859 = vsel %vm767, %v858, -inf
        %860 = vmax.xlane.f32.xlu0 %v859
        %v861 = vpop.xlane.xlu0 %860
        %v862 = vsub.f32 %v858, %v861
        %v863 = vmul.f32 %v862, 1.442695
        %v864 = vpow.pop %v863
        %v865 = vsel %vm767, %v864, 0.0
        %866 = vadd.xlane.f32.xlu0 %v865
        %v867 = vpop.xlane.xlu0 %866
        %v868 = vrcp.pop %v867
        %v869 = vmul.f32 %v867, %v868
        %v870 = vsub.f32 1.0, %v869
        %v871 = vmul.f32 %v868, %v870
        %v872 = vadd.f32 %v868, %v871
        %vm873 = vweird.f32 %v867
        %vm874 = vweird.f32 %v868
        %vm875 = vmor %vm873, %vm874
        %v876 = vsel %vm875, %v868, %v872
        %v877 = vand.u32 2147483647, %v867
        %vm878 = vcmp.eq.f32.partialorder %v877, 8.507059e+37
        %v879 = vand.u32 %v867, 2147483648
        %v880 = vor.u32 1.1754944e-38, %v879
        %v881 = vsel %vm878, %v880, %v876
        %v882 = vmul.f32 %v864, %v881
        %v883 = vpack.c.bf16 %v882, %v882
        %884 = vrot.lane.b32.xlu0 %v763, 56
        %v885 = vpop.permute.xlu0 %884
        %v887 = vsel %vm767, %v883, 0
        %v890 = vsel %vm818, %v885, 0
        %892 = vmatpush.bf16.msra.mxu0 0
        %893 = vmatpush.bf16.msra.mxu0 0
        %894 = vmatpush.bf16.msra.mxu0 0
        %895 = vmatpush.bf16.msra.mxu0 0
        %896 = vmatpush.bf16.msra.mxu0 0
        %897 = vmatpush.bf16.msra.mxu0 0
        %898 = vmatpush.bf16.msra.mxu0 0
        %899 = vmatpush.bf16.msra.mxu0 %v890
        %900 = vmatmul.bf16.gmra.mxu0 %v887
        %v901 = vpop.f32.mrf.mxu0
        %v902 = vadd.f32 0.0, %v901
        %v903 = vpop.f32.mrf.mxu0
        %904 = vdwg.mxu0
        %905 = vrot.lane.b32.xlu0 %v763, 112
        %v906 = vpop.permute.xlu0 %905
        %907 = vrot.lane.b32.xlu0 %v763, 80
        %v908 = vpop.permute.xlu0 %907
        %v910 = vsel %vm767, %v906, 0
        %v913 = vsel %vm767, %v908, 0
        %915 = vmatpush.bf16.xpose.msra.mxu0 0
        %916 = vmatpush.bf16.xpose.msra.mxu0 0
        %917 = vmatpush.bf16.xpose.msra.mxu0 0
        %918 = vmatpush.bf16.xpose.msra.mxu0 0
        %919 = vmatpush.bf16.xpose.msra.mxu0 0
        %920 = vmatpush.bf16.xpose.msra.mxu0 0
        %921 = vmatpush.bf16.xpose.msra.mxu0 0
        %922 = vmatpush.bf16.xpose.msra.mxu0 %v913
        %923 = vmatmul.bf16.gmra.mxu0 %v910
        %v924 = vpop.f32.mrf.mxu0
        %v925 = vadd.f32 0.0, %v924
        %v926 = vpop.f32.mrf.mxu0
        %927 = vdwg.mxu0
        %v928 = vmul.f32 %v925, 0.35355338
        %v929 = vsel %vm767, %v928, -inf
        %930 = vmax.xlane.f32.xlu0 %v929
        %v931 = vpop.xlane.xlu0 %930
        %v932 = vsub.f32 %v928, %v931
        %v933 = vmul.f32 %v932, 1.442695
        %v934 = vpow.pop %v933
        %v935 = vsel %vm767, %v934, 0.0
        %936 = vadd.xlane.f32.xlu0 %v935
        %v937 = vpop.xlane.xlu0 %936
        %v938 = vrcp.pop %v937
        %v939 = vmul.f32 %v937, %v938
        %v940 = vsub.f32 1.0, %v939
        %v941 = vmul.f32 %v938, %v940
        %v942 = vadd.f32 %v938, %v941
        %vm943 = vweird.f32 %v937
        %vm944 = vweird.f32 %v938
        %vm945 = vmor %vm943, %vm944
        %v946 = vsel %vm945, %v938, %v942
        %v947 = vand.u32 2147483647, %v937
        %vm948 = vcmp.eq.f32.partialorder %v947, 8.507059e+37
        %v949 = vand.u32 %v937, 2147483648
        %v950 = vor.u32 1.1754944e-38, %v949
        %v951 = vsel %vm948, %v950, %v946
        %v952 = vmul.f32 %v934, %v951
        %v953 = vpack.c.bf16 %v952, %v952
        %954 = vrot.lane.b32.xlu0 %v763, 48
        %v955 = vpop.permute.xlu0 %954
        %v957 = vsel %vm767, %v953, 0
        %v960 = vsel %vm818, %v955, 0
        %962 = vmatpush.bf16.msra.mxu0 0
        %963 = vmatpush.bf16.msra.mxu0 0
        %964 = vmatpush.bf16.msra.mxu0 0
        %965 = vmatpush.bf16.msra.mxu0 0
        %966 = vmatpush.bf16.msra.mxu0 0
        %967 = vmatpush.bf16.msra.mxu0 0
        %968 = vmatpush.bf16.msra.mxu0 0
        %969 = vmatpush.bf16.msra.mxu0 %v960
        %970 = vmatmul.bf16.gmra.mxu0 %v957
        %v971 = vpop.f32.mrf.mxu0
        %v972 = vadd.f32 0.0, %v971
        %v973 = vpop.f32.mrf.mxu0
        %974 = vdwg.mxu0
        %975 = vrot.lane.b32.xlu0 %v763, 104
        %v976 = vpop.permute.xlu0 %975
        %977 = vrot.lane.b32.xlu0 %v763, 72
        %v978 = vpop.permute.xlu0 %977
        %v980 = vsel %vm767, %v976, 0
        %v983 = vsel %vm767, %v978, 0
        %985 = vmatpush.bf16.xpose.msra.mxu0 0
        %986 = vmatpush.bf16.xpose.msra.mxu0 0
        %987 = vmatpush.bf16.xpose.msra.mxu0 0
        %988 = vmatpush.bf16.xpose.msra.mxu0 0
        %989 = vmatpush.bf16.xpose.msra.mxu0 0
        %990 = vmatpush.bf16.xpose.msra.mxu0 0
        %991 = vmatpush.bf16.xpose.msra.mxu0 0
        %992 = vmatpush.bf16.xpose.msra.mxu0 %v983
        %993 = vmatmul.bf16.gmra.mxu0 %v980
        %v994 = vpop.f32.mrf.mxu0
        %v995 = vadd.f32 0.0, %v994
        %v996 = vpop.f32.mrf.mxu0
        %997 = vdwg.mxu0
        %v998 = vmul.f32 %v995, 0.35355338
        %v999 = vsel %vm767, %v998, -inf
        %1000 = vmax.xlane.f32.xlu0 %v999
        %v1001 = vpop.xlane.xlu0 %1000
        %v1002 = vsub.f32 %v998, %v1001
        %v1003 = vmul.f32 %v1002, 1.442695
        %v1004 = vpow.pop %v1003
        %v1005 = vsel %vm767, %v1004, 0.0
        %1006 = vadd.xlane.f32.xlu0 %v1005
        %v1007 = vpop.xlane.xlu0 %1006
        %v1008 = vrcp.pop %v1007
        %v1009 = vmul.f32 %v1007, %v1008
        %v1010 = vsub.f32 1.0, %v1009
        %v1011 = vmul.f32 %v1008, %v1010
        %v1012 = vadd.f32 %v1008, %v1011
        %vm1013 = vweird.f32 %v1007
        %vm1014 = vweird.f32 %v1008
        %vm1015 = vmor %vm1013, %vm1014
        %v1016 = vsel %vm1015, %v1008, %v1012
        %v1017 = vand.u32 2147483647, %v1007
        %vm1018 = vcmp.eq.f32.partialorder %v1017, 8.507059e+37
        %v1019 = vand.u32 %v1007, 2147483648
        %v1020 = vor.u32 1.1754944e-38, %v1019
        %v1021 = vsel %vm1018, %v1020, %v1016
        %v1022 = vmul.f32 %v1004, %v1021
        %v1023 = vpack.c.bf16 %v1022, %v1022
        %1024 = vrot.lane.b32.xlu0 %v763, 40
        %v1025 = vpop.permute.xlu0 %1024
        %v1027 = vsel %vm767, %v1023, 0
        %v1030 = vsel %vm818, %v1025, 0
        %1032 = vmatpush.bf16.msra.mxu0 0
        %1033 = vmatpush.bf16.msra.mxu0 0
        %1034 = vmatpush.bf16.msra.mxu0 0
        %1035 = vmatpush.bf16.msra.mxu0 0
        %1036 = vmatpush.bf16.msra.mxu0 0
        %1037 = vmatpush.bf16.msra.mxu0 0
        %1038 = vmatpush.bf16.msra.mxu0 0
        %1039 = vmatpush.bf16.msra.mxu0 %v1030
        %1040 = vmatmul.bf16.gmra.mxu0 %v1027
        %v1041 = vpop.f32.mrf.mxu0
        %v1042 = vadd.f32 0.0, %v1041
        %v1043 = vpop.f32.mrf.mxu0
        %1044 = vdwg.mxu0
        %1046 = vrot.lane.b32.xlu0 %v902, 8
        %v1047 = vpop.permute.xlu0 %1046
        %1050 = vrot.lane.b32.xlu0 %v972, 16
        %v1051 = vpop.permute.xlu0 %1050
        %1054 = vrot.lane.b32.xlu0 %v1042, 24
        %v1055 = vpop.permute.xlu0 %1054
        %v1057 = vsel %vm767, %v832, %v1047
        %vm1058 = vcmask 130048
        %v1059 = vsel %vm1058, %v1057, %v1051
        %vm1060 = vcmask 195584
        %v1061 = vsel %vm1060, %v1059, %v1055
        %v1062 = vld [vmem:[%s657] sm:$0xf]
        %v1063 = vld [vmem:[%s657 + $0x4] sm:$0xf]
        %v1064 = vld [vmem:[%s657 + $0x8] sm:$0xf]
        %v1065 = vld [vmem:[%s657 + $0xc] sm:$0xf]
        %v1066 = vpack.c.bf16 %v1061, %v1061
        %v1071 = vunpack.c.l.b16 %v1062
        %v1072 = vunpack.c.l.b16 %v1063
        %v1073 = vunpack.c.l.b16 %v1064
        %v1074 = vunpack.c.l.b16 %v1065
        %v1075 = vpack.c.b16 %v1072, %v1071
        %v1076 = vpack.c.b16 %v1074, %v1073
        %v1080 = vsel %vm690, %v1066, 0
        %1082 = vmatpush.bf16.msra.mxu0 0
        %1083 = vmatpush.bf16.msra.mxu0 0
        %1084 = vmatpush.bf16.msra.mxu0 0
        %1085 = vmatpush.bf16.msra.mxu0 0
        %1086 = vmatpush.bf16.msra.mxu0 0
        %1087 = vmatpush.bf16.msra.mxu0 0
        %1088 = vmatpush.bf16.msra.mxu0 %v1076
        %1089 = vmatpush.bf16.msra.mxu0 %v1075
        %1090 = vmatmul.bf16.gmra.mxu0 %v1080
        %v1091 = vpop.f32.mrf.mxu0
        %v1092 = vadd.f32 %v689, %v1091
        %v1093 = vpop.f32.mrf.mxu0
        %1094 = vdwg.mxu0
        %v1095 = vsel %vm690, %v1092, 0.0
        %1096 = vadd.xlane.f32.xlu0 %v1095
        %v1097 = vpop.xlane.xlu0 %1096
        %v1098 = vmul.f32 %v1097, %v700
        %v1099 = vsub.f32 %v1092, %v1098
        %v1100 = vmul.f32 %v1099, %v1099
        %v1101 = vsel %vm690, %v1100, 0.0
        %1102 = vadd.xlane.f32.xlu0 %v1101
        %v1103 = vpop.xlane.xlu0 %1102
        %v1104 = vmul.f32 %v1103, %v700
        %v1105 = vadd.f32 %v1104, 1e-05
        %v1106 = vrsqrt.pop %v1105
        %v1107 = vmul.f32 %v1106, %v1105
        %v1108 = vmul.f32 %v1107, %v1106
        %v1109 = vmul.f32 0.5, %v1108
        %v1110 = vsub.f32 1.5, %v1109
        %v1111 = vmul.f32 %v1106, %v1110
        %vm1112 = vweird.f32 %v1105
        %vm1113 = vweird.f32 %v1106
        %vm1114 = vmor %vm1112, %vm1113
        %v1115 = vsel %vm1114, %v1106, %v1111
        %v1116 = vmul.f32 %v1099, %v1115
        %v1117 = vld [vmem:[%s557] sm:$0x1]
        %v1119 = vperm.slane %v1117, 0
        %v1121 = vmul.f32 %v1116, %v1119
        %v1122 = vld [vmem:[%s660] sm:$0x1]
        %v1124 = vperm.slane %v1122, 0
        %v1126 = vadd.f32 %v1121, %v1124
        %v1127 = vld [vmem:[%s665] sm:$0xf]
        %v1128 = vld [vmem:[%s665 + $0x4] sm:$0xf]
        %v1129 = vld [vmem:[%s665 + $0x8] sm:$0xf]
        %v1130 = vld [vmem:[%s665 + $0xc] sm:$0xf]
        %v1131 = vpack.c.bf16 %v1126, %v1126
        %v1132 = vld [vmem:[%s566] sm:$0x1]
        %v1134 = vperm.slane %v1132, 0
        %v1140 = vunpack.c.l.b16 %v1127
        %v1141 = vunpack.c.l.b16 %v1128
        %v1142 = vunpack.c.l.b16 %v1129
        %v1143 = vunpack.c.l.b16 %v1130
        %v1144 = vpack.c.b16 %v1141, %v1140
        %v1145 = vpack.c.b16 %v1143, %v1142
        %v1149 = vsel %vm690, %v1131, 0
        %1151 = vmatpush.bf16.msra.mxu0 0
        %1152 = vmatpush.bf16.msra.mxu0 0
        %1153 = vmatpush.bf16.msra.mxu0 0
        %1154 = vmatpush.bf16.msra.mxu0 0
        %1155 = vmatpush.bf16.msra.mxu0 0
        %1156 = vmatpush.bf16.msra.mxu0 0
        %1157 = vmatpush.bf16.msra.mxu0 %v1145
        %1158 = vmatpush.bf16.msra.mxu0 %v1144
        %1159 = vmatmul.bf16.gmra.mxu0 %v1149
        %v1160 = vpop.f32.mrf.mxu0
        %v1161 = vadd.f32 %v1134, %v1160
        %v1162 = vpop.f32.mrf.mxu0
        %1163 = vdwg.mxu0
        %v1164 = vmul.f32 %v1161, 0.5
        %v1165 = vmul.f32 %v1161, 0.70710677
        %v1166 = vmul.f32 %v1165, %v1165
        %v1167 = vmin.f32 16.0, %v1166
        %v1168 = vmul.f32 %v1167, 2.1237322e-06
        %v1169 = vadd.f32 %v1168, 0.00028619796
        %v1170 = vmul.f32 %v1167, %v1169
        %v1171 = vadd.f32 %v1170, 0.0036580483
        %v1172 = vmul.f32 %v1167, %v1171
        %v1173 = vadd.f32 %v1172, 0.05243302
        %v1174 = vmul.f32 %v1167, %v1173
        %v1175 = vadd.f32 %v1174, 0.18741608
        %v1176 = vmul.f32 %v1167, %v1175
        %v1177 = vadd.f32 %v1176, 1.1283791
        %v1178 = vmul.f32 %v1165, %v1177
        %v1179 = vmul.f32 %v1167, 3.8918573e-05
        %v1180 = vadd.f32 %v1179, 0.001143296
        %v1181 = vmul.f32 %v1167, %v1180
        %v1182 = vadd.f32 %v1181, 0.014752088
        %v1183 = vmul.f32 %v1167, %v1182
        %v1184 = vadd.f32 %v1183, 0.112945676
        %v1185 = vmul.f32 %v1167, %v1184
        %v1186 = vadd.f32 %v1185, 0.4994258
        %v1187 = vmul.f32 %v1167, %v1186
        %v1188 = vadd.f32 %v1187, 1.0
        %v1189 = vrcp.pop %v1188
        %v1190 = vmul.f32 %v1188, %v1189
        %v1191 = vsub.f32 1.0, %v1190
        %v1192 = vmul.f32 %v1189, %v1191
        %v1193 = vadd.f32 %v1189, %v1192
        %vm1194 = vweird.f32 %v1188
        %vm1195 = vweird.f32 %v1189
        %vm1196 = vmor %vm1194, %vm1195
        %v1197 = vsel %vm1196, %v1189, %v1193
        %v1198 = vand.u32 2147483647, %v1188
        %vm1199 = vcmp.eq.f32.partialorder %v1198, 8.507059e+37
        %v1200 = vand.u32 %v1188, 2147483648
        %v1201 = vor.u32 1.1754944e-38, %v1200
        %v1202 = vsel %vm1199, %v1201, %v1197
        %v1203 = vmul.f32 %v1178, %v1202
        %v1204 = vmin.f32 %v1203, 1.0
        %v1205 = vmax.f32 %v1204, -1.0
        %v1206 = vadd.f32 %v1205, 1.0
        %v1207 = vmul.f32 %v1164, %v1206
        %v1208 = vld [vmem:[%s670] sm:$0xf]
        %v1209 = vld [vmem:[%s670 + $0x4] sm:$0xf]
        %v1210 = vld [vmem:[%s670 + $0x8] sm:$0xf]
        %v1211 = vld [vmem:[%s670 + $0xc] sm:$0xf]
        %v1212 = vld [vmem:[%s670 + $0x10] sm:$0xf]
        %v1213 = vld [vmem:[%s670 + $0x14] sm:$0xf]
        %v1214 = vld [vmem:[%s670 + $0x18] sm:$0xf]
        %v1215 = vld [vmem:[%s670 + $0x1c] sm:$0xf]
        %v1216 = vpack.c.bf16 %v1207, %v1207
        %v1217 = vld [vmem:[%s673] sm:$0x1]
        %v1219 = vperm.slane %v1217, 0
        %v1229 = vunpack.c.l.b16 %v1208
        %v1230 = vunpack.c.l.b16 %v1209
        %v1231 = vunpack.c.l.b16 %v1210
        %v1232 = vunpack.c.l.b16 %v1211
        %v1233 = vunpack.c.l.b16 %v1212
        %v1234 = vunpack.c.l.b16 %v1213
        %v1235 = vunpack.c.l.b16 %v1214
        %v1236 = vunpack.c.l.b16 %v1215
        %v1237 = vpack.c.b16 %v1230, %v1229
        %v1238 = vpack.c.b16 %v1232, %v1231
        %v1239 = vpack.c.b16 %v1234, %v1233
        %v1240 = vpack.c.b16 %v1236, %v1235
        %vm1245 = vcmask 523264
        %v1247 = vsel %vm1245, %v1216, 0
        %1249 = vmatpush.bf16.msra.mxu0 0
        %1250 = vmatpush.bf16.msra.mxu0 0
        %1251 = vmatpush.bf16.msra.mxu0 0
        %1252 = vmatpush.bf16.msra.mxu0 0
        %1253 = vmatpush.bf16.msra.mxu0 %v1240
        %1254 = vmatpush.bf16.msra.mxu0 %v1239
        %1255 = vmatpush.bf16.msra.mxu0 %v1238
        %1256 = vmatpush.bf16.msra.mxu0 %v1237
        %1257 = vmatmul.bf16.gmra.mxu0 %v1247
        %v1258 = vpop.f32.mrf.mxu0
        %v1259 = vadd.f32 %v1219, %v1258
        %v1260 = vpop.f32.mrf.mxu0
        %1261 = vdwg.mxu0
        %v1262 = vadd.f32 %v1259, %v1092
        %1263 = vst.msk [vmem:[#allocation2] sm:$0xff] %vm690, %v1262
        %p1264 = scmp.eq.s32.totalorder %s39, 1
        %p1265 = scmp.eq.s32.totalorder %s39, 3
        %p1266 = por %p1264, %p1265
        // Predicated region
        $region89: #{tpu_custom_call.1} parent=63 // pred_check
          %p1267 = pneg %p1266
        $region90: #{tpu_custom_call.1} parent=63 // pred_check_branch
          %1269 = sbr.rel (%p1267) target = $region92
        $region91: #{tpu_custom_call.1} parent=63 // pred_region
          %1270 = vst.msk [vmem:[%s647] sm:$0xff] %vm690, %v1262
        $region92: #{tpu_custom_call.1} parent=63 // pred_fallthru
          _
        %s1271 = sand.u32 %s356, 1
        %s1272 = scalar_lea.sflag [#allocation5], %s1271
        %s1273 = sand.u32 %s356, 1
        %s1274 = smul.addr %s1273, 8
        %s1275 = scalar_lea.vmem [#allocation12], %s1274
        // Predicated region
        $region93: #{tpu_custom_call.1} parent=63 // pred_check
          %p1276 = pneg %p366
        $region94: #{tpu_custom_call.1} parent=63 // pred_check_branch
          %1278 = sbr.rel (%p1276) target = $region96
        $region95: #{tpu_custom_call.1} parent=63 // pred_region
          %p1279 = scmp.ge.s32.totalorder %s39, 2
          %s1280 = scalar_select %p1279, 1, 0
          %p1281 = scmp.ge.s32.totalorder %s39, 4
          %s1282 = scalar_select %p1281, 1, 0
          %s1283 = sadd.s32 %s1280, %s1282
          %p1284 = scmp.lt.s32.totalorder %s1283, 1
          %s1285 = scalar_select %p1284, %s1283, 1
          %1287 = vsyncadd %s1272, 0
          %s1288 = smul.addr %s1285, 2
          %s1289 = sadd.s32 %s38, %s1288
          %s1290 = smul.addr %s1289, 8
          %s1291 = scalar_lea.hbm %s11, %s1290
          %s1293 = sshll.u32 %s1275, 4
          %s1294 = int_to_ptr.vmem [resolvable:$true] %s1293
          %s1295 = sshll.u32 %s1291, 4
          %s1296 = int_to_ptr.hbm [resolvable:$true] %s1295
          %1298 = dma.vmem_to_hbm [thread:$0]  %s1294, 128, %s1296, %s1272
        $region96: #{tpu_custom_call.1} parent=63 // pred_fallthru
          _
      $region64: #{tpu_custom_call.1} parent=5 // pred_fallthru
        _
      %p1299 = scmp.le.s32.totalorder 2, %s29
      // Predicated region
      $region97: #{tpu_custom_call.1} parent=5 // pred_check
        %p1300 = pneg %p1299
      $region98: #{tpu_custom_call.1} parent=5 // pred_check_branch
        %1302 = sbr.rel (%p1300) target = $region100
      $region99: #{tpu_custom_call.1} parent=5 // pred_region
        %s1303 = ssub.s32 %s29, 2
        // Predicated region
        $region101: #{tpu_custom_call.1} parent=99 // pred_check
          %p1304 = pneg %p372
        $region102: #{tpu_custom_call.1} parent=99 // pred_check_branch
          %1306 = sbr.rel (%p1304) target = $region104
        $region103: #{tpu_custom_call.1} parent=99 // pred_region
          %s1307 = sand.u32 %s357, 1
          %s1308 = scalar_lea.sflag [#allocation5], %s1307
          %s1309 = sand.u32 %s357, 1
          %s1310 = smul.addr %s1309, 8
          %s1311 = scalar_lea.vmem [#allocation12], %s1310
          %1313 = dma.done %s1308, 128
        $region104: #{tpu_custom_call.1} parent=99 // pred_fallthru
          _
      $region100: #{tpu_custom_call.1} parent=5 // pred_fallthru
        _
    $region6: #{tpu_custom_call.1} parent=1 // loop_footer
      %s33 = sadd.s32 1, %s29
    $region7: #{tpu_custom_call.1} parent=1 // loop_footer_branch
      %28 = sbr.rel target = $region3
    $region8: #{tpu_custom_call.1} parent=1 // loop_exit
      _
    %1314 = vsyncpa [#allocation4], 1
    %s1315 = scalar_lea.sflag [#allocation4], 1
    %1316 = vsyncpa %s1315, 1
    %1317 = vsyncpa [#allocation7], 1
    %s1318 = scalar_lea.sflag [#allocation7], 1
    %1319 = vsyncpa %s1318, 1
    %1320 = vsyncpa [#allocation10], 1
    %s1321 = scalar_lea.sflag [#allocation10], 1
    %1322 = vsyncpa %s1321, 1
    %1323 = vsyncpa [#allocation5], 1
    %s1324 = scalar_lea.sflag [#allocation5], 1
    %1325 = vsyncpa %s1324, 1

</llo_original>
